<compile_context>
chip_gen: v7x
topology: tpu7x:2x2x1
jax: 0.10.0
libtpu: 0.0.40
codegen_flags: <defaults>
</compile_context>

<pallas_src>
import functools

import jax
import jax.numpy as jnp
from jax.experimental import pallas as pl
from jax.experimental.pallas import tpu as pltpu

CIN = 64        # fixed by the module: 64 -> 64 channels
COUT = 64
IMMC = 4
H = 16          # demo spatial size
W = 16


def _agent_kernel(x_ref, w1_ref, b1_ref, w3r_ref, b3_ref, mask_ref, o_ref,
                  hpad_ref, col_ref, *, h, w, halo):
    """One (layer, batch-block) tile per grid step.

    x_ref   : (1, B_blk, CIN, H*W)       input features, channel-major
    w1_ref  : (1, CPAD, CIN)             1x1 conv weight, zero-padded rows
    b1_ref  : (1, CPAD, 1)
    w3r_ref : (1, COUT, 9*CPAD)          3x3 conv weight, tap-major im2col layout
    b3_ref  : (1, COUT, 1)
    mask_ref: (9, B_blk*H*W)             per-tap boundary masks (0/1 f32)
    o_ref   : (1, B_blk, COUT, H*W)
    hpad_ref: scratch (CPAD, 2*halo + B_blk*H*W)  zero-haloed intermediate
    col_ref : scratch (9*CPAD, B_blk*H*W)         im2col operand
    """
    bblk = x_ref.shape[1]
    hw = h * w
    p_tot = bblk * hw
    cpad = hpad_ref.shape[0]

    w1 = w1_ref[0]                       # (CPAD, CIN)
    b1 = b1_ref[0]                       # (CPAD, 1)
    w3r = w3r_ref[0]                     # (COUT, 9*CPAD)
    b3 = b3_ref[0]                       # (COUT, 1)

    # Zero the lane halos (two full-tile aligned stores). The centre region is
    # fully overwritten below every step; halos only feed lanes whose mask is
    # zero, but they must be finite (stale VMEM could hold NaNs).
    hpad_ref[:, 0:halo] = jnp.zeros((cpad, halo), jnp.float32)
    hpad_ref[:, halo + p_tot:2 * halo + p_tot] = jnp.zeros(
        (cpad, halo), jnp.float32)

    # 1x1 conv + bias + ReLU (per batch element; (CPAD, HW) aligned stores).
    for b in range(bblk):
        x = x_ref[0, b]                                        # (CIN, HW)
        mid = jnp.dot(w1, x, preferred_element_type=jnp.float32)
        hpad_ref[:, halo + b * hw:halo + (b + 1) * hw] = (
            jnp.maximum(mid + b1, 0.0))

    # im2col: 9 lane-shifted, boundary-masked taps. Each write is a full
    # 8-sublane-aligned (CPAD, P) slab; masks come from the prefetched,
    # grid-invariant mask input (no per-step iota/compare rebuild).
    t = 0
    for di in (-1, 0, 1):
        for dj in (-1, 0, 1):
            k = di * w + dj
            shifted = hpad_ref[:, halo + k:halo + k + p_tot]   # (CPAD, P)
            m = mask_ref[pl.ds(t, 1), :]                       # (1, P)
            col_ref[t * cpad:(t + 1) * cpad, :] = shifted * m
            t += 1

    # 3x3 conv as per-batch (COUT, 9*CPAD) @ (9*CPAD, HW) matmuls + bias.
    # Each result tile is (64, HW) = 16 vregs at HW=256, so nothing spills and
    # each output store is an unmasked lane-dense slab.
    for b in range(bblk):
        out_b = jnp.dot(w3r, col_ref[:, b * hw:(b + 1) * hw],
                        preferred_element_type=jnp.float32) + b3
        o_ref[0, b] = out_b.astype(o_ref.dtype)


@functools.partial(jax.jit, static_argnames=("h", "w", "b_blk"))
def _run_agents(x_all, w1p, b1p, w3rp, b3p, *, h, w, b_blk):
    num_l, n, cin, hw = x_all.shape
    cpad = w1p.shape[1]
    cout = w3rp.shape[1]
    kk = w3rp.shape[2]
    nb = n // b_blk
    p_tot = b_blk * hw
    halo = ((w + 1 + 127) // 128) * 128   # lane halo >= max tap shift, aligned

    # Boundary masks: pure function of (b_blk, h, w); constant-folded by XLA
    # and DMA'd into VMEM exactly once (grid-invariant index_map below).
    lane = jnp.arange(p_tot, dtype=jnp.int32)
    xc = lane % w
    yr = (lane // w) % h
    masks = []
    for di in (-1, 0, 1):
        for dj in (-1, 0, 1):
            masks.append((xc + dj >= 0) & (xc + dj < w) &
                         (yr + di >= 0) & (yr + di < h))
    mask = jnp.stack(masks, axis=0).astype(jnp.float32)        # (9, P)

    kernel = functools.partial(_agent_kernel, h=h, w=w, halo=halo)
    return pl.pallas_call(
        kernel,
        out_shape=jax.ShapeDtypeStruct((num_l, n, cout, hw), x_all.dtype),
        grid_spec=pltpu.PrefetchScalarGridSpec(
            num_scalar_prefetch=0,
            grid=(num_l, nb),
            in_specs=[
                pl.BlockSpec((1, b_blk, cin, hw), lambda l, b: (l, b, 0, 0)),
                pl.BlockSpec((1, cpad, cin), lambda l, b: (l, 0, 0)),
                pl.BlockSpec((1, cpad, 1), lambda l, b: (l, 0, 0)),
                pl.BlockSpec((1, cout, kk), lambda l, b: (l, 0, 0)),
                pl.BlockSpec((1, cout, 1), lambda l, b: (l, 0, 0)),
                pl.BlockSpec((9, p_tot), lambda l, b: (0, 0)),
            ],
            out_specs=pl.BlockSpec((1, b_blk, cout, hw),
                                   lambda l, b: (l, b, 0, 0)),
            scratch_shapes=[
                pltpu.VMEM((cpad, 2 * halo + p_tot), jnp.float32),
                pltpu.VMEM((9 * cpad, p_tot), jnp.float32),
            ],
        ),
        compiler_params=pltpu.CompilerParams(
            dimension_semantics=("parallel", "parallel"),
            vmem_limit_bytes=32 * 1024 * 1024,
        ),
    )(x_all, w1p, b1p, w3rp, b3p, mask)


def _pick_batch_block(n, num_layers, max_block=32):
    """Largest divisor of n that is <= max_block while keeping >= 2 total
    parallel grid points (layer axis counts too) whenever that is possible."""
    best = 1
    for d in range(1, min(n, max_block) + 1):
        if n % d != 0:
            continue
        if num_layers * (n // d) >= 2 or (num_layers == 1 and n == 1):
            best = d
    return best


def _prep_params(w1, b1, w3, b3, immc):
    """Kernel-shaped, sublane-padded weights (prepared once at init)."""
    cpad = ((immc + 7) // 8) * 8
    w1p = jnp.zeros((cpad, CIN), jnp.float32).at[:immc].set(w1)
    b1p = jnp.zeros((cpad, 1), jnp.float32).at[:immc, 0].set(b1)
    # w3rp[o, (kh*3 + kw)*cpad + ci] = w3[o, ci, kh, kw]  (zero for ci >= immc)
    w3t = jnp.transpose(w3, (0, 2, 3, 1))                  # (COUT, 3, 3, immc)
    w3tp = jnp.pad(w3t, ((0, 0), (0, 0), (0, 0), (0, cpad - immc)))
    w3rp = jnp.reshape(w3tp, (COUT, 9 * cpad))
    b3k = jnp.reshape(b3, (COUT, 1))
    return w1p, b1p, w3rp, b3k


class SMSRParasiticV0:
    """JAX/Pallas port of SMSR_parasitic_v0: one agent per target layer index."""

    def __init__(self, target_layer_index, immc=IMMC, seed=0):
        self.immc = immc
        self.target_layer_index = list(target_layer_index)
        self.params = {}
        base = jax.random.PRNGKey(seed)
        bnd1 = 1.0 / (CIN ** 0.5)             # Kaiming-uniform-style bounds
        bnd3 = 1.0 / ((immc * 9) ** 0.5)      # (matches nn.Conv2d default scale)
        for l in self.target_layer_index:
            k = jax.random.fold_in(base, int(l))
            k1, k2, k3, k4 = jax.random.split(k, 4)
            w1 = jax.random.uniform(k1, (immc, CIN), jnp.float32, -bnd1, bnd1)
            b1 = jax.random.uniform(k2, (immc,), jnp.float32, -bnd1, bnd1)
            w3 = jax.random.uniform(k3, (COUT, immc, 3, 3), jnp.float32,
                                    -bnd3, bnd3)
            b3 = jax.random.uniform(k4, (COUT,), jnp.float32, -bnd3, bnd3)
            w1p, b1p, w3rp, b3k = _prep_params(w1, b1, w3, b3, immc)
            self.params[l] = {
                "w1": w1, "b1": b1, "w3": w3, "b3": b3,
                "w1p": w1p, "b1p": b1p, "w3rp": w3rp, "b3k": b3k,
            }

    def __call__(self, input_dict):
        for l in input_dict:
            if l not in self.target_layer_index:
                raise AssertionError(
                    "[ERRO] core layer " + str(l) + " does not have an agent")
        # Fuse all layers with the same feature-map shape into ONE pallas_call.
        groups = {}
        for l in input_dict:
            groups.setdefault(tuple(input_dict[l].shape), []).append(l)
        agent_fmap = {}
        for shape, layers in groups.items():
            n, cin, h, w = shape
            assert cin == CIN, "agent expects 64 input channels"
            x_all = jnp.stack(
                [jnp.reshape(input_dict[l], (n, cin, h * w)) for l in layers],
                axis=0)
            w1p = jnp.stack([self.params[l]["w1p"] for l in layers], axis=0)
            b1p = jnp.stack([self.params[l]["b1p"] for l in layers], axis=0)
            w3rp = jnp.stack([self.params[l]["w3rp"] for l in layers], axis=0)
            b3k = jnp.stack([self.params[l]["b3k"] for l in layers], axis=0)
            b_blk = _pick_batch_block(n, len(layers))
            y = _run_agents(x_all, w1p, b1p, w3rp, b3k, h=h, w=w, b_blk=b_blk)
            y = y.reshape(len(layers), n, COUT, h, w)
            for i, l in enumerate(layers):
                agent_fmap[l] = y[i]
        return agent_fmap


def _ref_agent(x_nchw, p, immc=IMMC):
    """Pure-JAX reference: conv1x1 -> ReLU -> conv3x3(pad=1), NCHW."""
    w1 = p["w1"].reshape(immc, CIN, 1, 1)
    hmid = jax.lax.conv_general_dilated(
        x_nchw, w1, (1, 1), "VALID",
        dimension_numbers=("NCHW", "OIHW", "NCHW"),
        precision=jax.lax.Precision.HIGHEST)
    hmid = jnp.maximum(hmid + p["b1"].reshape(1, immc, 1, 1), 0.0)
    y = jax.lax.conv_general_dilated(
        hmid, p["w3"], (1, 1), ((1, 1), (1, 1)),
        dimension_numbers=("NCHW", "OIHW", "NCHW"),
        precision=jax.lax.Precision.HIGHEST)
    return y + p["b3"].reshape(1, COUT, 1, 1)


if __name__ == "__main__":
    target_layers = [0, 2]
    model = SMSRParasiticV0(target_layers, immc=IMMC, seed=0)

    key = jax.random.PRNGKey(0)
    input_dict = {}
    for l in target_layers:
        kl = jax.random.fold_in(key, int(l) + 100)
        input_dict[l] = jax.random.normal(kl, (2, CIN, H, W), jnp.float32)

    out = model(input_dict)

    for l in target_layers:
        y = jax.block_until_ready(out[l])
        assert y.shape == (2, COUT, H, W)
        assert y.dtype == jnp.float32
        ref = _ref_agent(input_dict[l], model.params[l])
        err = float(jnp.max(jnp.abs(y - ref)))
        assert jnp.allclose(y, ref, atol=2e-2, rtol=2e-2), f"mismatch: {err}"
    print("KERNEL_OK")
</pallas_src>

<mosaic_0001>
module attributes {stable_mosaic.version = 11 : i64} {
  func.func @_agent_kernel(%arg0: i32, %arg1: i32, %arg2: memref<1x2x64x256xf32, #tpu.memory_space<vmem>>, %arg3: memref<1x8x64xf32, #tpu.memory_space<vmem>>, %arg4: memref<1x8x1xf32, #tpu.memory_space<vmem>>, %arg5: memref<1x64x72xf32, #tpu.memory_space<vmem>>, %arg6: memref<1x64x1xf32, #tpu.memory_space<vmem>>, %arg7: memref<9x512xf32, #tpu.memory_space<vmem>>, %arg8: memref<1x2x64x256xf32, #tpu.memory_space<vmem>>, %arg9: memref<8x768xf32, #tpu.memory_space<vmem>>, %arg10: memref<72x512xf32, #tpu.memory_space<vmem>>) attributes {dimension_semantics = [#tpu.dimension_semantics<parallel>, #tpu.dimension_semantics<parallel>], iteration_bounds = array<i64: 2, 1>, scalar_prefetch = 0 : i64, scratch_operands = 2 : i64, tpu.core_type = #tpu.core_type<tc>, window_params = [{transform_indices = @transform_0, window_bounds = array<i64: 1, 2, 64, 256>}, {transform_indices = @transform_1, window_bounds = array<i64: 1, 8, 64>}, {transform_indices = @transform_2, window_bounds = array<i64: 1, 8, 1>}, {transform_indices = @transform_3, window_bounds = array<i64: 1, 64, 72>}, {transform_indices = @transform_4, window_bounds = array<i64: 1, 64, 1>}, {pipeline_mode = #tpu.pipeline_mode<synchronous>, transform_indices = @transform_5, window_bounds = array<i64: 9, 512>}, {transform_indices = @transform_6, window_bounds = array<i64: 1, 2, 64, 256>}]} {
    %c0 = arith.constant 0 : index
    %c0_0 = arith.constant 0 : index
    %c0_1 = arith.constant 0 : index
    %0 = vector.load %arg3[%c0, %c0_0, %c0_1] : memref<1x8x64xf32, #tpu.memory_space<vmem>>, vector<1x8x64xf32>
    %1 = vector.shape_cast %0 : vector<1x8x64xf32> to vector<8x64xf32>
    %c0_2 = arith.constant 0 : index
    %c0_3 = arith.constant 0 : index
    %c0_4 = arith.constant 0 : index
    %2 = vector.load %arg4[%c0_2, %c0_3, %c0_4] : memref<1x8x1xf32, #tpu.memory_space<vmem>>, vector<1x8x1xf32>
    %3 = vector.shape_cast %2 : vector<1x8x1xf32> to vector<8x1xf32>
    %c0_5 = arith.constant 0 : index
    %c0_6 = arith.constant 0 : index
    %c0_7 = arith.constant 0 : index
    %4 = vector.load %arg5[%c0_5, %c0_6, %c0_7] : memref<1x64x72xf32, #tpu.memory_space<vmem>>, vector<1x64x72xf32>
    %5 = vector.shape_cast %4 : vector<1x64x72xf32> to vector<64x72xf32>
    %c0_8 = arith.constant 0 : index
    %c0_9 = arith.constant 0 : index
    %c0_10 = arith.constant 0 : index
    %6 = vector.load %arg6[%c0_8, %c0_9, %c0_10] : memref<1x64x1xf32, #tpu.memory_space<vmem>>, vector<1x64x1xf32>
    %7 = vector.shape_cast %6 : vector<1x64x1xf32> to vector<64x1xf32>
    %cst = arith.constant 0.000000e+00 : f32
    %8 = vector.broadcast %cst : f32 to vector<8x128xf32>
    %c0_11 = arith.constant 0 : index
    %c0_12 = arith.constant 0 : index
    %9 = vector.load %arg9[%c0_11, %c0_12] : memref<8x768xf32, #tpu.memory_space<vmem>>, vector<8x128xf32>
    tpu.vector_store %arg9[%c0_11, %c0_12], %8 {strides = array<i32>} : memref<8x768xf32, #tpu.memory_space<vmem>>, vector<8x128xf32>,
    %cst_13 = arith.constant 0.000000e+00 : f32
    %10 = vector.broadcast %cst_13 : f32 to vector<8x128xf32>
    %c0_14 = arith.constant 0 : index
    %c640 = arith.constant 640 : index
    %11 = vector.load %arg9[%c0_14, %c640] : memref<8x768xf32, #tpu.memory_space<vmem>>, vector<8x128xf32>
    tpu.vector_store %arg9[%c0_14, %c640], %10 {strides = array<i32>} : memref<8x768xf32, #tpu.memory_space<vmem>>, vector<8x128xf32>,
    %c0_15 = arith.constant 0 : index
    %c0_16 = arith.constant 0 : index
    %c0_17 = arith.constant 0 : index
    %c0_18 = arith.constant 0 : index
    %12 = vector.load %arg2[%c0_15, %c0_16, %c0_17, %c0_18] : memref<1x2x64x256xf32, #tpu.memory_space<vmem>>, vector<1x1x64x256xf32>
    %13 = vector.shape_cast %12 : vector<1x1x64x256xf32> to vector<64x256xf32>
    %cst_19 = arith.constant dense<0.000000e+00> : vector<8x256xf32>
    %14 = tpu.matmul %1, %13, %cst_19 {dimension_numbers = #tpu.dot_dimension_numbers<[1], [0], [0], [1], [0, 0, 1, 1], [], []>} : vector<8x64xf32>, vector<64x256xf32>, vector<8x256xf32> -> vector<8x256xf32>
    %15 = vector.broadcast %3 : vector<8x1xf32> to vector<8x256xf32>
    %16 = arith.addf %14, %15 : vector<8x256xf32>
    %cst_20 = arith.constant 0.000000e+00 : f32
    %17 = vector.broadcast %cst_20 : f32 to vector<8x256xf32>
    %18 = arith.maximumf %16, %17 : vector<8x256xf32>
    %c0_21 = arith.constant 0 : index
    %c128 = arith.constant 128 : index
    %19 = vector.load %arg9[%c0_21, %c128] : memref<8x768xf32, #tpu.memory_space<vmem>>, vector<8x256xf32>
    tpu.vector_store %arg9[%c0_21, %c128], %18 {strides = array<i32>} : memref<8x768xf32, #tpu.memory_space<vmem>>, vector<8x256xf32>,
    %c0_22 = arith.constant 0 : index
    %c1 = arith.constant 1 : index
    %c0_23 = arith.constant 0 : index
    %c0_24 = arith.constant 0 : index
    %20 = vector.load %arg2[%c0_22, %c1, %c0_23, %c0_24] : memref<1x2x64x256xf32, #tpu.memory_space<vmem>>, vector<1x1x64x256xf32>
    %21 = vector.shape_cast %20 : vector<1x1x64x256xf32> to vector<64x256xf32>
    %cst_25 = arith.constant dense<0.000000e+00> : vector<8x256xf32>
    %22 = tpu.matmul %1, %21, %cst_25 {dimension_numbers = #tpu.dot_dimension_numbers<[1], [0], [0], [1], [0, 0, 1, 1], [], []>} : vector<8x64xf32>, vector<64x256xf32>, vector<8x256xf32> -> vector<8x256xf32>
    %23 = vector.broadcast %3 : vector<8x1xf32> to vector<8x256xf32>
    %24 = arith.addf %22, %23 : vector<8x256xf32>
    %cst_26 = arith.constant 0.000000e+00 : f32
    %25 = vector.broadcast %cst_26 : f32 to vector<8x256xf32>
    %26 = arith.maximumf %24, %25 : vector<8x256xf32>
    %c0_27 = arith.constant 0 : index
    %c384 = arith.constant 384 : index
    %27 = vector.load %arg9[%c0_27, %c384] : memref<8x768xf32, #tpu.memory_space<vmem>>, vector<8x256xf32>
    tpu.vector_store %arg9[%c0_27, %c384], %26 {strides = array<i32>} : memref<8x768xf32, #tpu.memory_space<vmem>>, vector<8x256xf32>,
    %c0_28 = arith.constant 0 : index
    %c111 = arith.constant 111 : index
    %28 = vector.load %arg9[%c0_28, %c111] : memref<8x768xf32, #tpu.memory_space<vmem>>, vector<8x512xf32>
    %c0_29 = arith.constant 0 : index
    %c0_30 = arith.constant 0 : index
    %29 = vector.load %arg7[%c0_29, %c0_30] : memref<9x512xf32, #tpu.memory_space<vmem>>, vector<1x512xf32>
    %30 = vector.broadcast %29 : vector<1x512xf32> to vector<8x512xf32>
    %31 = arith.mulf %28, %30 : vector<8x512xf32>
    %c0_31 = arith.constant 0 : index
    %c0_32 = arith.constant 0 : index
    %32 = vector.load %arg10[%c0_31, %c0_32] : memref<72x512xf32, #tpu.memory_space<vmem>>, vector<8x512xf32>
    tpu.vector_store %arg10[%c0_31, %c0_32], %31 {strides = array<i32>} : memref<72x512xf32, #tpu.memory_space<vmem>>, vector<8x512xf32>,
    %c0_33 = arith.constant 0 : index
    %c112 = arith.constant 112 : index
    %33 = vector.load %arg9[%c0_33, %c112] : memref<8x768xf32, #tpu.memory_space<vmem>>, vector<8x512xf32>
    %c1_34 = arith.constant 1 : index
    %c0_35 = arith.constant 0 : index
    %34 = vector.load %arg7[%c1_34, %c0_35] : memref<9x512xf32, #tpu.memory_space<vmem>>, vector<1x512xf32>
    %35 = vector.broadcast %34 : vector<1x512xf32> to vector<8x512xf32>
    %36 = arith.mulf %33, %35 : vector<8x512xf32>
    %c8 = arith.constant 8 : index
    %c0_36 = arith.constant 0 : index
    %37 = vector.load %arg10[%c8, %c0_36] : memref<72x512xf32, #tpu.memory_space<vmem>>, vector<8x512xf32>
    tpu.vector_store %arg10[%c8, %c0_36], %36 {strides = array<i32>} : memref<72x512xf32, #tpu.memory_space<vmem>>, vector<8x512xf32>,
    %c0_37 = arith.constant 0 : index
    %c113 = arith.constant 113 : index
    %38 = vector.load %arg9[%c0_37, %c113] : memref<8x768xf32, #tpu.memory_space<vmem>>, vector<8x512xf32>
    %c2 = arith.constant 2 : index
    %c0_38 = arith.constant 0 : index
    %39 = vector.load %arg7[%c2, %c0_38] : memref<9x512xf32, #tpu.memory_space<vmem>>, vector<1x512xf32>
    %40 = vector.broadcast %39 : vector<1x512xf32> to vector<8x512xf32>
    %41 = arith.mulf %38, %40 : vector<8x512xf32>
    %c16 = arith.constant 16 : index
    %c0_39 = arith.constant 0 : index
    %42 = vector.load %arg10[%c16, %c0_39] : memref<72x512xf32, #tpu.memory_space<vmem>>, vector<8x512xf32>
    tpu.vector_store %arg10[%c16, %c0_39], %41 {strides = array<i32>} : memref<72x512xf32, #tpu.memory_space<vmem>>, vector<8x512xf32>,
    %c0_40 = arith.constant 0 : index
    %c127 = arith.constant 127 : index
    %43 = vector.load %arg9[%c0_40, %c127] : memref<8x768xf32, #tpu.memory_space<vmem>>, vector<8x512xf32>
    %c3 = arith.constant 3 : index
    %c0_41 = arith.constant 0 : index
    %44 = vector.load %arg7[%c3, %c0_41] : memref<9x512xf32, #tpu.memory_space<vmem>>, vector<1x512xf32>
    %45 = vector.broadcast %44 : vector<1x512xf32> to vector<8x512xf32>
    %46 = arith.mulf %43, %45 : vector<8x512xf32>
    %c24 = arith.constant 24 : index
    %c0_42 = arith.constant 0 : index
    %47 = vector.load %arg10[%c24, %c0_42] : memref<72x512xf32, #tpu.memory_space<vmem>>, vector<8x512xf32>
    tpu.vector_store %arg10[%c24, %c0_42], %46 {strides = array<i32>} : memref<72x512xf32, #tpu.memory_space<vmem>>, vector<8x512xf32>,
    %c0_43 = arith.constant 0 : index
    %c128_44 = arith.constant 128 : index
    %48 = vector.load %arg9[%c0_43, %c128_44] : memref<8x768xf32, #tpu.memory_space<vmem>>, vector<8x512xf32>
    %c4 = arith.constant 4 : index
    %c0_45 = arith.constant 0 : index
    %49 = vector.load %arg7[%c4, %c0_45] : memref<9x512xf32, #tpu.memory_space<vmem>>, vector<1x512xf32>
    %50 = vector.broadcast %49 : vector<1x512xf32> to vector<8x512xf32>
    %51 = arith.mulf %48, %50 : vector<8x512xf32>
    %c32 = arith.constant 32 : index
    %c0_46 = arith.constant 0 : index
    %52 = vector.load %arg10[%c32, %c0_46] : memref<72x512xf32, #tpu.memory_space<vmem>>, vector<8x512xf32>
    tpu.vector_store %arg10[%c32, %c0_46], %51 {strides = array<i32>} : memref<72x512xf32, #tpu.memory_space<vmem>>, vector<8x512xf32>,
    %c0_47 = arith.constant 0 : index
    %c129 = arith.constant 129 : index
    %53 = vector.load %arg9[%c0_47, %c129] : memref<8x768xf32, #tpu.memory_space<vmem>>, vector<8x512xf32>
    %c5 = arith.constant 5 : index
    %c0_48 = arith.constant 0 : index
    %54 = vector.load %arg7[%c5, %c0_48] : memref<9x512xf32, #tpu.memory_space<vmem>>, vector<1x512xf32>
    %55 = vector.broadcast %54 : vector<1x512xf32> to vector<8x512xf32>
    %56 = arith.mulf %53, %55 : vector<8x512xf32>
    %c40 = arith.constant 40 : index
    %c0_49 = arith.constant 0 : index
    %57 = vector.load %arg10[%c40, %c0_49] : memref<72x512xf32, #tpu.memory_space<vmem>>, vector<8x512xf32>
    tpu.vector_store %arg10[%c40, %c0_49], %56 {strides = array<i32>} : memref<72x512xf32, #tpu.memory_space<vmem>>, vector<8x512xf32>,
    %c0_50 = arith.constant 0 : index
    %c143 = arith.constant 143 : index
    %58 = vector.load %arg9[%c0_50, %c143] : memref<8x768xf32, #tpu.memory_space<vmem>>, vector<8x512xf32>
    %c6 = arith.constant 6 : index
    %c0_51 = arith.constant 0 : index
    %59 = vector.load %arg7[%c6, %c0_51] : memref<9x512xf32, #tpu.memory_space<vmem>>, vector<1x512xf32>
    %60 = vector.broadcast %59 : vector<1x512xf32> to vector<8x512xf32>
    %61 = arith.mulf %58, %60 : vector<8x512xf32>
    %c48 = arith.constant 48 : index
    %c0_52 = arith.constant 0 : index
    %62 = vector.load %arg10[%c48, %c0_52] : memref<72x512xf32, #tpu.memory_space<vmem>>, vector<8x512xf32>
    tpu.vector_store %arg10[%c48, %c0_52], %61 {strides = array<i32>} : memref<72x512xf32, #tpu.memory_space<vmem>>, vector<8x512xf32>,
    %c0_53 = arith.constant 0 : index
    %c144 = arith.constant 144 : index
    %63 = vector.load %arg9[%c0_53, %c144] : memref<8x768xf32, #tpu.memory_space<vmem>>, vector<8x512xf32>
    %c7 = arith.constant 7 : index
    %c0_54 = arith.constant 0 : index
    %64 = vector.load %arg7[%c7, %c0_54] : memref<9x512xf32, #tpu.memory_space<vmem>>, vector<1x512xf32>
    %65 = vector.broadcast %64 : vector<1x512xf32> to vector<8x512xf32>
    %66 = arith.mulf %63, %65 : vector<8x512xf32>
    %c56 = arith.constant 56 : index
    %c0_55 = arith.constant 0 : index
    %67 = vector.load %arg10[%c56, %c0_55] : memref<72x512xf32, #tpu.memory_space<vmem>>, vector<8x512xf32>
    tpu.vector_store %arg10[%c56, %c0_55], %66 {strides = array<i32>} : memref<72x512xf32, #tpu.memory_space<vmem>>, vector<8x512xf32>,
    %c0_56 = arith.constant 0 : index
    %c145 = arith.constant 145 : index
    %68 = vector.load %arg9[%c0_56, %c145] : memref<8x768xf32, #tpu.memory_space<vmem>>, vector<8x512xf32>
    %c8_57 = arith.constant 8 : index
    %c0_58 = arith.constant 0 : index
    %69 = vector.load %arg7[%c8_57, %c0_58] : memref<9x512xf32, #tpu.memory_space<vmem>>, vector<1x512xf32>
    %70 = vector.broadcast %69 : vector<1x512xf32> to vector<8x512xf32>
    %71 = arith.mulf %68, %70 : vector<8x512xf32>
    %c64 = arith.constant 64 : index
    %c0_59 = arith.constant 0 : index
    %72 = vector.load %arg10[%c64, %c0_59] : memref<72x512xf32, #tpu.memory_space<vmem>>, vector<8x512xf32>
    tpu.vector_store %arg10[%c64, %c0_59], %71 {strides = array<i32>} : memref<72x512xf32, #tpu.memory_space<vmem>>, vector<8x512xf32>,
    %c0_60 = arith.constant 0 : index
    %c0_61 = arith.constant 0 : index
    %73 = vector.load %arg10[%c0_60, %c0_61] : memref<72x512xf32, #tpu.memory_space<vmem>>, vector<72x256xf32>
    %cst_62 = arith.constant dense<0.000000e+00> : vector<64x256xf32>
    %74 = tpu.matmul %5, %73, %cst_62 {dimension_numbers = #tpu.dot_dimension_numbers<[1], [0], [0], [1], [0, 0, 1, 1], [], []>} : vector<64x72xf32>, vector<72x256xf32>, vector<64x256xf32> -> vector<64x256xf32>
    %75 = vector.broadcast %7 : vector<64x1xf32> to vector<64x256xf32>
    %76 = arith.addf %74, %75 : vector<64x256xf32>
    %c0_63 = arith.constant 0 : index
    %c0_64 = arith.constant 0 : index
    %c0_65 = arith.constant 0 : index
    %c0_66 = arith.constant 0 : index
    %77 = vector.load %arg8[%c0_63, %c0_64, %c0_65, %c0_66] : memref<1x2x64x256xf32, #tpu.memory_space<vmem>>, vector<1x1x64x256xf32>
    %78 = vector.shape_cast %77 : vector<1x1x64x256xf32> to vector<64x256xf32>
    %79 = vector.shape_cast %76 : vector<64x256xf32> to vector<1x1x64x256xf32>
    tpu.vector_store %arg8[%c0_63, %c0_64, %c0_65, %c0_66], %79 {strides = array<i32>} : memref<1x2x64x256xf32, #tpu.memory_space<vmem>>, vector<1x1x64x256xf32>,
    %c0_67 = arith.constant 0 : index
    %c256 = arith.constant 256 : index
    %80 = vector.load %arg10[%c0_67, %c256] : memref<72x512xf32, #tpu.memory_space<vmem>>, vector<72x256xf32>
    %cst_68 = arith.constant dense<0.000000e+00> : vector<64x256xf32>
    %81 = tpu.matmul %5, %80, %cst_68 {dimension_numbers = #tpu.dot_dimension_numbers<[1], [0], [0], [1], [0, 0, 1, 1], [], []>} : vector<64x72xf32>, vector<72x256xf32>, vector<64x256xf32> -> vector<64x256xf32>
    %82 = vector.broadcast %7 : vector<64x1xf32> to vector<64x256xf32>
    %83 = arith.addf %81, %82 : vector<64x256xf32>
    %c0_69 = arith.constant 0 : index
    %c1_70 = arith.constant 1 : index
    %c0_71 = arith.constant 0 : index
    %c0_72 = arith.constant 0 : index
    %84 = vector.load %arg8[%c0_69, %c1_70, %c0_71, %c0_72] : memref<1x2x64x256xf32, #tpu.memory_space<vmem>>, vector<1x1x64x256xf32>
    %85 = vector.shape_cast %84 : vector<1x1x64x256xf32> to vector<64x256xf32>
    %86 = vector.shape_cast %83 : vector<64x256xf32> to vector<1x1x64x256xf32>
    tpu.vector_store %arg8[%c0_69, %c1_70, %c0_71, %c0_72], %86 {strides = array<i32>} : memref<1x2x64x256xf32, #tpu.memory_space<vmem>>, vector<1x1x64x256xf32>,
    return
  }
  func.func @transform_0(%arg0: i32, %arg1: i32) -> (i32, i32, i32, i32) {
    %c0_i32 = arith.constant 0 : i32
    %c0_i32_0 = arith.constant 0 : i32
    %c0_i32_1 = arith.constant 0 : i32
    return %arg0, %arg1, %c0_i32, %c0_i32_0 : i32, i32, i32, i32
  }
  func.func @transform_1(%arg0: i32, %arg1: i32) -> (i32, i32, i32) {
    %c0_i32 = arith.constant 0 : i32
    %c0_i32_0 = arith.constant 0 : i32
    %c0_i32_1 = arith.constant 0 : i32
    return %arg0, %c0_i32, %c0_i32_0 : i32, i32, i32
  }
  func.func @transform_2(%arg0: i32, %arg1: i32) -> (i32, i32, i32) {
    %c0_i32 = arith.constant 0 : i32
    %c0_i32_0 = arith.constant 0 : i32
    %c0_i32_1 = arith.constant 0 : i32
    return %arg0, %c0_i32, %c0_i32_0 : i32, i32, i32
  }
  func.func @transform_3(%arg0: i32, %arg1: i32) -> (i32, i32, i32) {
    %c0_i32 = arith.constant 0 : i32
    %c0_i32_0 = arith.constant 0 : i32
    %c0_i32_1 = arith.constant 0 : i32
    return %arg0, %c0_i32, %c0_i32_0 : i32, i32, i32
  }
  func.func @transform_4(%arg0: i32, %arg1: i32) -> (i32, i32, i32) {
    %c0_i32 = arith.constant 0 : i32
    %c0_i32_0 = arith.constant 0 : i32
    %c0_i32_1 = arith.constant 0 : i32
    return %arg0, %c0_i32, %c0_i32_0 : i32, i32, i32
  }
  func.func @transform_5(%arg0: i32, %arg1: i32) -> (i32, i32) {
    %c0_i32 = arith.constant 0 : i32
    %c0_i32_0 = arith.constant 0 : i32
    %c0_i32_1 = arith.constant 0 : i32
    return %c0_i32, %c0_i32_0 : i32, i32
  }
  func.func @transform_6(%arg0: i32, %arg1: i32) -> (i32, i32, i32, i32) {
    %c0_i32 = arith.constant 0 : i32
    %c0_i32_0 = arith.constant 0 : i32
    %c0_i32_1 = arith.constant 0 : i32
    return %arg0, %arg1, %c0_i32, %c0_i32_0 : i32, i32, i32, i32
  }
}

</mosaic_0001>

<llo_original>
// kernel: _run_agents.1
$region0: #{_run_agents.1}
  #allocation0 [shape = 'u32[]', space=smem, size = 0x4, offset = 0x4, fixed_abs, tag = 'smem constant byte address 0x4 - core index']
  #allocation1 [shape = 'u32[144,128]{1,0:T(1,128)}', space=vmem, size = 0x12000, scoped, tag = 'internal scratch']
  #allocation2 [shape = 'f32[8,768]{1,0:T(8,128)}', space=vmem, size = 0x6000, scoped, tag = 'scratch operand']
  #allocation3 [shape = 'f32[72,512]{1,0:T(8,128)}', space=vmem, size = 0x24000, scoped, tag = 'scratch operand']
  %s0 = inlined_call_operand.hbm [shape: f32[2,2,64,256], index: 0, kind: input, shape index: {}]
  %s1 = inlined_call_operand.vmem [shape: f32[2,8,64], index: 1, kind: input, shape index: {}]
  %s2 = inlined_call_operand.vmem [shape: f32[2,8,1], index: 2, kind: input, shape index: {}]
  %s3 = inlined_call_operand.vmem [shape: f32[2,64,72], index: 3, kind: input, shape index: {}]
  %s4 = inlined_call_operand.vmem [shape: f32[2,64,1], index: 4, kind: input, shape index: {}]
  %s5 = inlined_call_operand.vmem [shape: f32[9,512], index: 5, kind: input, shape index: {}]
  %s6 = inlined_call_operand.hbm [shape: f32[2,2,64,256], index: 6, kind: output, shape index: {}]
  %s7 = sld [smem:[#allocation0]]
  $region61: #{_run_agents.1} parent=0
    _
  %s9 = ssub.s32 1, %s7
  %s10 = scalar_select 0, %s9, %s7
  $region1: #{_run_agents.1} parent=0
    #allocation4 [shape = 'u8[262144]{0}', space=vmem, size = 0x40000, scoped, tag = 'input window, operand 0']
    #allocation5 [shape = 's32[2]{0}', space=sflag, size = 0x8, scoped, tag = 'scoped memory for _run_agents.1']
    #allocation6 [shape = 's32[2]{0}', space=sflag, size = 0x8, scoped, tag = 'scoped memory for _run_agents.1']
    #allocation7 [shape = 'u8[262144]{0}', space=vmem, size = 0x40000, scoped, tag = 'output window, operand 0']
    %11 = vsyncpa [#allocation5], 0
    %s12 = scalar_lea.sflag [#allocation5], 1
    %13 = vsyncpa %s12, 0
    %14 = vsyncpa [#allocation6], 0
    %s15 = scalar_lea.sflag [#allocation6], 1
    %16 = vsyncpa %s15, 0
    loop: start=0, step=1, limit=4
    $region2: #{_run_agents.1} parent=1 // loop_pre_header
      _
    $region3: #{_run_agents.1} parent=1 // loop_header
      %s18 = sphi 0, %s22
      %p19 = scmp.ge.s32.totalorder %s18, 4
      %s25 = sphi 0, %s37
      %s26 = sphi 0, %s33
      %s27 = sphi 0, %s25
      %s28 = sphi 0, %s26
      %s29 = sphi 0, %s27
      %s30 = sphi 0, %s28
      %s42 = sphi 0, %s44
      %s45 = sphi 0, %s42
      %s46 = sphi 0, %s45
      %s62 = sphi 0, %s46
      %s68 = sphi 0, %s70
      %s71 = sphi 0, %s68
      %s72 = sphi 0, %s71
      %s88 = sphi 0, %s72
      %s94 = sphi 0, %s96
      %s97 = sphi 0, %s94
      %s98 = sphi 0, %s97
      %s114 = sphi 0, %s98
      %s120 = sphi 0, %s122
      %s123 = sphi 0, %s120
      %s124 = sphi 0, %s123
      %s140 = sphi 0, %s124
      %s146 = sphi 0, %s148
      %s149 = sphi 0, %s146
      %s150 = sphi 0, %s149
      %s166 = sphi 0, %s150
      %s170 = sphi 0, %s170
      %s172 = sphi 0, %s170
      %s173 = sphi 0, %s172
      %s187 = sphi 0, %s173
      %s195 = sphi 0, %s197
      %s198 = sphi 0, %s195
      %s199 = sphi 0, %s198
      %s215 = sphi 0, %s199
    $region4: #{_run_agents.1} parent=1 // loop_header_branch
      %21 = sbr.rel (%p19) target = $region8
    $region5: #{_run_agents.1} parent=1 // loop_body
      %s23 = ssub.s32 %s18, 1
      %s24 = ssub.s32 %s18, 2
      %s31 = sadd.s32 1, %s26
      %p32 = scmp.ge.s32.totalorder %s31, 1
      %s33 = scalar_select %p32, 0, %s31
      %s34 = sadd.s32 1, %s25
      %s35 = scalar_select %p32, %s34, %s25
      %p36 = scmp.ge.s32.totalorder %s35, 2
      %s37 = scalar_select %p36, 0, %s35
      %s38 = ssub.s32 %s25, %s37
      %s39 = ssub.s32 %s26, %s33
      %s40 = sor.u32 %s38, %s39
      %p41 = scmp.eq.s32.totalorder %s40, 0
      %s43 = sadd.s32 %s42, 1
      %s44 = scalar_select %p41, %s42, %s43
      %p47 = pneg %p41
      %p48 = scmp.eq.s32.totalorder %s18, 1
      %p49 = por %p47, %p48
      %p50 = scmp.ne.s32.totalorder %s42, %s45
      %p51 = scmp.eq.s32.totalorder %s18, 0
      %p52 = por %p50, %p51
      %p53 = scmp.ne.s32.totalorder %s42, %s45
      %p54 = scmp.eq.s32.totalorder %s23, 1
      %p55 = por %p53, %p54
      %p56 = scmp.ne.s32.totalorder %s45, %s46
      %p57 = scmp.eq.s32.totalorder %s23, 0
      %p58 = por %p56, %p57
      %p59 = scmp.ne.s32.totalorder %s45, %s46
      %p60 = scmp.eq.s32.totalorder %s24, 1
      %p61 = por %p59, %p60
      %p63 = scmp.ne.s32.totalorder %s46, %s62
      %p64 = scmp.eq.s32.totalorder %s24, 0
      %p65 = por %p63, %p64
      %s66 = ssub.s32 %s25, %s37
      %p67 = scmp.eq.s32.totalorder %s66, 0
      %s69 = sadd.s32 %s68, 1
      %s70 = scalar_select %p67, %s68, %s69
      %p73 = pneg %p67
      %p74 = scmp.eq.s32.totalorder %s18, 1
      %p75 = por %p73, %p74
      %p76 = scmp.ne.s32.totalorder %s68, %s71
      %p77 = scmp.eq.s32.totalorder %s18, 0
      %p78 = por %p76, %p77
      %p79 = scmp.ne.s32.totalorder %s68, %s71
      %p80 = scmp.eq.s32.totalorder %s23, 1
      %p81 = por %p79, %p80
      %p82 = scmp.ne.s32.totalorder %s71, %s72
      %p83 = scmp.eq.s32.totalorder %s23, 0
      %p84 = por %p82, %p83
      %p85 = scmp.ne.s32.totalorder %s71, %s72
      %p86 = scmp.eq.s32.totalorder %s24, 1
      %p87 = por %p85, %p86
      %p89 = scmp.ne.s32.totalorder %s72, %s88
      %p90 = scmp.eq.s32.totalorder %s24, 0
      %p91 = por %p89, %p90
      %s92 = ssub.s32 %s25, %s37
      %p93 = scmp.eq.s32.totalorder %s92, 0
      %s95 = sadd.s32 %s94, 1
      %s96 = scalar_select %p93, %s94, %s95
      %p99 = pneg %p93
      %p100 = scmp.eq.s32.totalorder %s18, 1
      %p101 = por %p99, %p100
      %p102 = scmp.ne.s32.totalorder %s94, %s97
      %p103 = scmp.eq.s32.totalorder %s18, 0
      %p104 = por %p102, %p103
      %p105 = scmp.ne.s32.totalorder %s94, %s97
      %p106 = scmp.eq.s32.totalorder %s23, 1
      %p107 = por %p105, %p106
      %p108 = scmp.ne.s32.totalorder %s97, %s98
      %p109 = scmp.eq.s32.totalorder %s23, 0
      %p110 = por %p108, %p109
      %p111 = scmp.ne.s32.totalorder %s97, %s98
      %p112 = scmp.eq.s32.totalorder %s24, 1
      %p113 = por %p111, %p112
      %p115 = scmp.ne.s32.totalorder %s98, %s114
      %p116 = scmp.eq.s32.totalorder %s24, 0
      %p117 = por %p115, %p116
      %s118 = ssub.s32 %s25, %s37
      %p119 = scmp.eq.s32.totalorder %s118, 0
      %s121 = sadd.s32 %s120, 1
      %s122 = scalar_select %p119, %s120, %s121
      %p125 = pneg %p119
      %p126 = scmp.eq.s32.totalorder %s18, 1
      %p127 = por %p125, %p126
      %p128 = scmp.ne.s32.totalorder %s120, %s123
      %p129 = scmp.eq.s32.totalorder %s18, 0
      %p130 = por %p128, %p129
      %p131 = scmp.ne.s32.totalorder %s120, %s123
      %p132 = scmp.eq.s32.totalorder %s23, 1
      %p133 = por %p131, %p132
      %p134 = scmp.ne.s32.totalorder %s123, %s124
      %p135 = scmp.eq.s32.totalorder %s23, 0
      %p136 = por %p134, %p135
      %p137 = scmp.ne.s32.totalorder %s123, %s124
      %p138 = scmp.eq.s32.totalorder %s24, 1
      %p139 = por %p137, %p138
      %p141 = scmp.ne.s32.totalorder %s124, %s140
      %p142 = scmp.eq.s32.totalorder %s24, 0
      %p143 = por %p141, %p142
      %s144 = ssub.s32 %s25, %s37
      %p145 = scmp.eq.s32.totalorder %s144, 0
      %s147 = sadd.s32 %s146, 1
      %s148 = scalar_select %p145, %s146, %s147
      %p151 = pneg %p145
      %p152 = scmp.eq.s32.totalorder %s18, 1
      %p153 = por %p151, %p152
      %p154 = scmp.ne.s32.totalorder %s146, %s149
      %p155 = scmp.eq.s32.totalorder %s18, 0
      %p156 = por %p154, %p155
      %p157 = scmp.ne.s32.totalorder %s146, %s149
      %p158 = scmp.eq.s32.totalorder %s23, 1
      %p159 = por %p157, %p158
      %p160 = scmp.ne.s32.totalorder %s149, %s150
      %p161 = scmp.eq.s32.totalorder %s23, 0
      %p162 = por %p160, %p161
      %p163 = scmp.ne.s32.totalorder %s149, %s150
      %p164 = scmp.eq.s32.totalorder %s24, 1
      %p165 = por %p163, %p164
      %p167 = scmp.ne.s32.totalorder %s150, %s166
      %p168 = scmp.eq.s32.totalorder %s24, 0
      %p169 = por %p167, %p168
      %s171 = sadd.s32 %s170, 1
      %p174 = scmp.eq.s32.totalorder %s18, 1
      %p175 = scmp.ne.s32.totalorder %s170, %s172
      %p176 = scmp.eq.s32.totalorder %s18, 0
      %p177 = por %p175, %p176
      %p178 = scmp.ne.s32.totalorder %s170, %s172
      %p179 = scmp.eq.s32.totalorder %s23, 1
      %p180 = por %p178, %p179
      %p181 = scmp.ne.s32.totalorder %s172, %s173
      %p182 = scmp.eq.s32.totalorder %s23, 0
      %p183 = por %p181, %p182
      %p184 = scmp.ne.s32.totalorder %s172, %s173
      %p185 = scmp.eq.s32.totalorder %s24, 1
      %p186 = por %p184, %p185
      %p188 = scmp.ne.s32.totalorder %s173, %s187
      %p189 = scmp.eq.s32.totalorder %s24, 0
      %p190 = por %p188, %p189
      %s191 = ssub.s32 %s25, %s37
      %s192 = ssub.s32 %s26, %s33
      %s193 = sor.u32 %s191, %s192
      %p194 = scmp.eq.s32.totalorder %s193, 0
      %s196 = sadd.s32 %s195, 1
      %s197 = scalar_select %p194, %s195, %s196
      %p200 = pneg %p194
      %p201 = scmp.eq.s32.totalorder %s18, 1
      %p202 = por %p200, %p201
      %p203 = scmp.ne.s32.totalorder %s195, %s198
      %p204 = scmp.eq.s32.totalorder %s18, 0
      %p205 = por %p203, %p204
      %p206 = scmp.ne.s32.totalorder %s195, %s198
      %p207 = scmp.eq.s32.totalorder %s23, 1
      %p208 = por %p206, %p207
      %p209 = scmp.ne.s32.totalorder %s198, %s199
      %p210 = scmp.eq.s32.totalorder %s23, 0
      %p211 = por %p209, %p210
      %p212 = scmp.ne.s32.totalorder %s198, %s199
      %p213 = scmp.eq.s32.totalorder %s24, 1
      %p214 = por %p212, %p213
      %p216 = scmp.ne.s32.totalorder %s199, %s215
      %p217 = scmp.eq.s32.totalorder %s24, 0
      %p218 = por %p216, %p217
      %p219 = scmp.le.s32.totalorder 1, %s18
      %p220 = scmp.lt.s32.totalorder %s18, 3
      %p221 = pnand %p219, %p220
      %p222 = pneg %p221
      // Predicated region
      $region9: #{_run_agents.1} parent=5 // pred_check
        _
      $region10: #{_run_agents.1} parent=5 // pred_check_branch
        %224 = sbr.rel (%p221) target = $region12
      $region11: #{_run_agents.1} parent=5 // pred_region
        %s225 = ssub.s32 %s18, 1
        // Predicated region
        $region13: #{_run_agents.1} parent=11 // pred_check
          %p226 = pneg %p183
        $region14: #{_run_agents.1} parent=11 // pred_check_branch
          %228 = sbr.rel (%p226) target = $region16
        $region15: #{_run_agents.1} parent=11 // pred_region
          _
        $region16: #{_run_agents.1} parent=11 // pred_fallthru
          _
      $region12: #{_run_agents.1} parent=5 // pred_fallthru
        _
      %p229 = scmp.lt.s32.totalorder %s18, 2
      // Predicated region
      $region17: #{_run_agents.1} parent=5 // pred_check
        %p230 = pneg %p229
      $region18: #{_run_agents.1} parent=5 // pred_check_branch
        %232 = sbr.rel (%p230) target = $region20
      $region19: #{_run_agents.1} parent=5 // pred_region
        // Predicated region
        $region21: #{_run_agents.1} parent=19 // pred_check
          %p233 = pneg %p52
        $region22: #{_run_agents.1} parent=19 // pred_check_branch
          %235 = sbr.rel (%p233) target = $region24
        $region23: #{_run_agents.1} parent=19 // pred_region
          %s236 = sand.u32 %s42, 1
          %s237 = scalar_lea.sflag [#allocation5], %s236
          %s238 = sand.u32 %s42, 1
          %s239 = smul.addr %s238, 256
          %s240 = scalar_lea.vmem [#allocation4], %s239
          %s241 = smul.u32 2, %s26
          %s243 = ssub.s32 4096, 4096
          %244 = vsyncadd %s237, %s243
          %s245 = smul.addr %s241, 16
          %s246 = smul.addr %s25, 32
          %s247 = sadd.s32 %s245, %s246
          %s248 = smul.addr %s247, 128
          %s249 = scalar_lea.hbm %s0, %s248
          %s250 = sshll.u32 %s240, 4
          %s251 = int_to_ptr.vmem [resolvable:$true] %s250
          %256 = dma.hbm_to_vmem [thread:$0]  %s249, 4096, %s251, %s237, 256, 256, 16
        $region24: #{_run_agents.1} parent=19 // pred_fallthru
          _
        // Predicated region
        $region25: #{_run_agents.1} parent=19 // pred_check
          %p257 = pneg %p78
        $region26: #{_run_agents.1} parent=19 // pred_check_branch
          %259 = sbr.rel (%p257) target = $region28
        $region27: #{_run_agents.1} parent=19 // pred_region
          %p260 = scmp.lt.s32.totalorder %s25, 1
          %s261 = scalar_select %p260, %s25, 1
          %s262 = smul.addr %s261, 8
          %s263 = scalar_lea.vmem %s1, %s262
        $region28: #{_run_agents.1} parent=19 // pred_fallthru
          _
        // Predicated region
        $region29: #{_run_agents.1} parent=19 // pred_check
          %p264 = pneg %p104
        $region30: #{_run_agents.1} parent=19 // pred_check_branch
          %266 = sbr.rel (%p264) target = $region32
        $region31: #{_run_agents.1} parent=19 // pred_region
          %p267 = scmp.lt.s32.totalorder %s25, 1
          %s268 = scalar_select %p267, %s25, 1
          %s269 = smul.addr %s268, 8
          %s270 = scalar_lea.vmem %s2, %s269
        $region32: #{_run_agents.1} parent=19 // pred_fallthru
          _
        // Predicated region
        $region33: #{_run_agents.1} parent=19 // pred_check
          %p271 = pneg %p130
        $region34: #{_run_agents.1} parent=19 // pred_check_branch
          %273 = sbr.rel (%p271) target = $region36
        $region35: #{_run_agents.1} parent=19 // pred_region
          %p274 = scmp.lt.s32.totalorder %s25, 1
          %s275 = scalar_select %p274, %s25, 1
          %s276 = smul.addr %s275, 8
          %s277 = smul.addr %s276, 8
          %s278 = scalar_lea.vmem %s3, %s277
        $region36: #{_run_agents.1} parent=19 // pred_fallthru
          _
        // Predicated region
        $region37: #{_run_agents.1} parent=19 // pred_check
          %p279 = pneg %p156
        $region38: #{_run_agents.1} parent=19 // pred_check_branch
          %281 = sbr.rel (%p279) target = $region40
        $region39: #{_run_agents.1} parent=19 // pred_region
          %p282 = scmp.lt.s32.totalorder %s25, 1
          %s283 = scalar_select %p282, %s25, 1
          %s284 = smul.addr %s283, 8
          %s285 = smul.addr %s284, 8
          %s286 = scalar_lea.vmem %s4, %s285
        $region40: #{_run_agents.1} parent=19 // pred_fallthru
          _
      $region20: #{_run_agents.1} parent=5 // pred_fallthru
        _
      %p287 = scmp.le.s32.totalorder 1, %s18
      %p288 = scmp.lt.s32.totalorder %s18, 3
      %p289 = pnand %p287, %p288
      %p290 = pneg %p289
      // Predicated region
      $region41: #{_run_agents.1} parent=5 // pred_check
        _
      $region42: #{_run_agents.1} parent=5 // pred_check_branch
        %292 = sbr.rel (%p289) target = $region44
      $region43: #{_run_agents.1} parent=5 // pred_region
        %s293 = ssub.s32 %s18, 1
        %s294 = sand.u32 %s45, 1
        %s295 = scalar_lea.sflag [#allocation5], %s294
        %s296 = sand.u32 %s45, 1
        %s297 = smul.addr %s296, 256
        %s298 = scalar_lea.vmem [#allocation4], %s297
        // Predicated region
        $region45: #{_run_agents.1} parent=43 // pred_check
          %p299 = pneg %p58
        $region46: #{_run_agents.1} parent=43 // pred_check_branch
          %301 = sbr.rel (%p299) target = $region48
        $region47: #{_run_agents.1} parent=43 // pred_region
          %302 = dma.done %s295, 4096
        $region48: #{_run_agents.1} parent=43 // pred_fallthru
          _
        %s303 = sand.u32 %s45, 1
        %s304 = scalar_lea.sflag [#allocation5], %s303
        %s305 = sand.u32 %s45, 1
        %s306 = smul.addr %s305, 256
        %s307 = scalar_lea.vmem [#allocation4], %s306
        %p308 = pneg %p58
        %p309 = pneg %p55
        %p310 = scmp.lt.s32.totalorder %s27, 1
        %s311 = scalar_select %p310, %s27, 1
        %s312 = smul.addr %s311, 8
        %s313 = scalar_lea.vmem %s1, %s312
        %p314 = pneg %p84
        %p315 = pneg %p81
        %p316 = scmp.lt.s32.totalorder %s27, 1
        %s317 = scalar_select %p316, %s27, 1
        %s318 = smul.addr %s317, 8
        %s319 = scalar_lea.vmem %s2, %s318
        %p320 = pneg %p110
        %p321 = pneg %p107
        %p322 = scmp.lt.s32.totalorder %s27, 1
        %s323 = scalar_select %p322, %s27, 1
        %s324 = smul.addr %s323, 8
        %s325 = smul.addr %s324, 8
        %s326 = scalar_lea.vmem %s3, %s325
        %p327 = pneg %p136
        %p328 = pneg %p133
        %p329 = scmp.lt.s32.totalorder %s27, 1
        %s330 = scalar_select %p329, %s27, 1
        %s331 = smul.addr %s330, 8
        %s332 = smul.addr %s331, 8
        %s333 = scalar_lea.vmem %s4, %s332
        %p334 = pneg %p162
        %p335 = pneg %p159
        %p336 = pneg %p183
        %p337 = pneg %p180
        %p338 = pneg %p211
        %p339 = pneg %p208
        %s340 = sand.u32 %s198, 1
        %s341 = scalar_lea.sflag [#allocation6], %s340
        %s342 = sand.u32 %s198, 1
        %s343 = smul.addr %s342, 256
        %s344 = scalar_lea.vmem [#allocation7], %s343
        %s345 = smul.u32 2, %s28
        %p346 = scmp.lt.s32.totalorder %s27, 1
        %s347 = scalar_select %p346, %s27, 1
        %s348 = smul.addr %s347, 8
        %s349 = scalar_lea.vmem %s1, %s348
        %p350 = scmp.lt.s32.totalorder %s27, 1
        %s351 = scalar_select %p350, %s27, 1
        %s352 = smul.addr %s351, 8
        %s353 = scalar_lea.vmem %s2, %s352
        %p354 = scmp.lt.s32.totalorder %s27, 1
        %s355 = scalar_select %p354, %s27, 1
        %s356 = smul.addr %s355, 8
        %s357 = smul.addr %s356, 8
        %s358 = scalar_lea.vmem %s3, %s357
        %p359 = scmp.lt.s32.totalorder %s27, 1
        %s360 = scalar_select %p359, %s27, 1
        %s361 = smul.addr %s360, 8
        %s362 = smul.addr %s361, 8
        %s363 = scalar_lea.vmem %s4, %s362
        %s364 = smul.u32 2, %s28
        %v365 = vld [vmem:[%s349] sm:$0xff]
        %v366 = vld [vmem:[%s353] sm:$0xff]
        %v367 = vld [vmem:[%s358] sm:$0xff]
        %v368 = vld [vmem:[%s358 + $0x8] sm:$0xff]
        %v369 = vld [vmem:[%s358 + $0x10] sm:$0xff]
        %v370 = vld [vmem:[%s358 + $0x18] sm:$0xff]
        %v371 = vld [vmem:[%s358 + $0x20] sm:$0xff]
        %v372 = vld [vmem:[%s358 + $0x28] sm:$0xff]
        %v373 = vld [vmem:[%s358 + $0x30] sm:$0xff]
        %v374 = vld [vmem:[%s358 + $0x38] sm:$0xff]
        %v375 = vld [vmem:[%s363] sm:$0xff]
        %v376 = vld [vmem:[%s363 + $0x8] sm:$0xff]
        %v377 = vld [vmem:[%s363 + $0x10] sm:$0xff]
        %v378 = vld [vmem:[%s363 + $0x18] sm:$0xff]
        %v379 = vld [vmem:[%s363 + $0x20] sm:$0xff]
        %v380 = vld [vmem:[%s363 + $0x28] sm:$0xff]
        %v381 = vld [vmem:[%s363 + $0x30] sm:$0xff]
        %v382 = vld [vmem:[%s363 + $0x38] sm:$0xff]
        %383 = vst [vmem:[#allocation2] sm:$0xff] 0.0
        %384 = vst [vmem:[#allocation2 + $0x28] sm:$0xff] 0.0
        %v385 = vld [vmem:[%s298] sm:$0xff]
        %v386 = vld [vmem:[%s298 + $0x8] sm:$0xff]
        %v387 = vld [vmem:[%s298 + $0x10] sm:$0xff]
        %v388 = vld [vmem:[%s298 + $0x18] sm:$0xff]
        %v389 = vld [vmem:[%s298 + $0x20] sm:$0xff]
        %v390 = vld [vmem:[%s298 + $0x28] sm:$0xff]
        %v391 = vld [vmem:[%s298 + $0x30] sm:$0xff]
        %v392 = vld [vmem:[%s298 + $0x38] sm:$0xff]
        %v393 = vld [vmem:[%s298 + $0x40] sm:$0xff]
        %v394 = vld [vmem:[%s298 + $0x48] sm:$0xff]
        %v395 = vld [vmem:[%s298 + $0x50] sm:$0xff]
        %v396 = vld [vmem:[%s298 + $0x58] sm:$0xff]
        %v397 = vld [vmem:[%s298 + $0x60] sm:$0xff]
        %v398 = vld [vmem:[%s298 + $0x68] sm:$0xff]
        %v399 = vld [vmem:[%s298 + $0x70] sm:$0xff]
        %v400 = vld [vmem:[%s298 + $0x78] sm:$0xff]
        %402 = vset.pattern.permute.xlu0 0
        %403 = vperm.xlu0 %402, %v366
        %v404 = vpop.permute.xlu0 %403
        %vm406 = vcmask 523264
        %v408 = vsel %vm406, %v365, 0
        %410 = vmatprep.subr.mxu0 %v386
        %411 = vmatpush1.msra.mxu0 %v385
        %412 = vmatprep.subr.mxu0 %v388
        %413 = vmatpush1.msra.mxu0 %v387
        %414 = vmatprep.subr.mxu0 %v390
        %415 = vmatpush1.msra.mxu0 %v389
        %416 = vmatprep.subr.mxu0 %v392
        %417 = vmatpush1.msra.mxu0 %v391
        %418 = vmatprep.subr.mxu0 %v394
        %419 = vmatpush1.msra.mxu0 %v393
        %420 = vmatprep.subr.mxu0 %v396
        %421 = vmatpush1.msra.mxu0 %v395
        %422 = vmatprep.subr.mxu0 %v398
        %423 = vmatpush1.msra.mxu0 %v397
        %424 = vmatprep.subr.mxu0 %v400
        %425 = vmatpush1.msra.mxu0 %v399
        %426 = vmatprep.subr.mxu0 0.0
        %427 = vmatpush1.msra.mxu0 0.0
        %428 = vmatprep.subr.mxu0 0.0
        %429 = vmatpush1.msra.mxu0 0.0
        %430 = vmatprep.subr.mxu0 0.0
        %431 = vmatpush1.msra.mxu0 0.0
        %432 = vmatprep.subr.mxu0 0.0
        %433 = vmatpush1.msra.mxu0 0.0
        %434 = vmatprep.subr.mxu0 0.0
        %435 = vmatpush1.msra.mxu0 0.0
        %436 = vmatprep.subr.mxu0 0.0
        %437 = vmatpush1.msra.mxu0 0.0
        %438 = vmatprep.subr.mxu0 0.0
        %439 = vmatpush1.msra.mxu0 0.0
        %440 = vmatprep.subr.mxu0 0.0
        %441 = vmatpush1.msra.mxu0 0.0
        %442 = vmatprep.subr.mxu0 0.0
        %443 = vmatpush1.msra.mxu0 0.0
        %444 = vmatprep.subr.mxu0 0.0
        %445 = vmatpush1.msra.mxu0 0.0
        %446 = vmatprep.subr.mxu0 0.0
        %447 = vmatpush1.msra.mxu0 0.0
        %448 = vmatprep.subr.mxu0 0.0
        %449 = vmatpush1.msra.mxu0 0.0
        %450 = vmatprep.subr.mxu0 0.0
        %451 = vmatpush1.msra.mxu0 0.0
        %452 = vmatprep.subr.mxu0 0.0
        %453 = vmatpush1.msra.mxu0 0.0
        %454 = vmatprep.subr.mxu0 0.0
        %455 = vmatpush1.msra.mxu0 0.0
        %456 = vmatprep.subr.mxu0 0.0
        %457 = vmatpush1.msra.mxu0 0.0
        %458 = vmatprep.subr.mxu0 0.0
        %459 = vmatpush1.msra.mxu0 0.0
        %460 = vmatprep.subr.mxu0 0.0
        %461 = vmatpush1.msra.mxu0 0.0
        %462 = vmatprep.subr.mxu0 0.0
        %463 = vmatpush1.msra.mxu0 0.0
        %464 = vmatprep.subr.mxu0 0.0
        %465 = vmatpush1.msra.mxu0 0.0
        %466 = vmatprep.subr.mxu0 0.0
        %467 = vmatpush1.msra.mxu0 0.0
        %468 = vmatprep.subr.mxu0 0.0
        %469 = vmatpush1.msra.mxu0 0.0
        %470 = vmatprep.subr.mxu0 0.0
        %471 = vmatpush1.msra.mxu0 0.0
        %472 = vmatprep.subr.mxu0 0.0
        %473 = vmatpush1.msra.mxu0 0.0
        %474 = vmatprep.mubr.f32.mxu0 0.0
        %475 = vmatmul.mubr.f32.gmra.mrb[0].mxu0 %v408
        %v476 = vpop.f32.mrb[0].mxu0
        %v477 = vadd.f32 %v404, %v476
        %v478 = vpop.f32.mrb[0].mxu0
        %v479 = vadd.f32 %v404, %v478
        %480 = vdwg.mxu0
        %v481 = vmax.f32 %v477, 0.0
        %v482 = vmax.f32 %v479, 0.0
        %483 = vst [vmem:[#allocation2 + $0x8] sm:$0xff] %v481
        %484 = vst [vmem:[#allocation2 + $0x10] sm:$0xff] %v482
        %s485 = scalar_lea.vmem %s298, 128 [#allocation4]
        %v486 = vld [vmem:[%s485] sm:$0xff]
        %v487 = vld [vmem:[%s485 + $0x8] sm:$0xff]
        %v488 = vld [vmem:[%s485 + $0x10] sm:$0xff]
        %v489 = vld [vmem:[%s485 + $0x18] sm:$0xff]
        %v490 = vld [vmem:[%s485 + $0x20] sm:$0xff]
        %v491 = vld [vmem:[%s485 + $0x28] sm:$0xff]
        %v492 = vld [vmem:[%s485 + $0x30] sm:$0xff]
        %v493 = vld [vmem:[%s485 + $0x38] sm:$0xff]
        %v494 = vld [vmem:[%s485 + $0x40] sm:$0xff]
        %v495 = vld [vmem:[%s485 + $0x48] sm:$0xff]
        %v496 = vld [vmem:[%s485 + $0x50] sm:$0xff]
        %v497 = vld [vmem:[%s485 + $0x58] sm:$0xff]
        %v498 = vld [vmem:[%s485 + $0x60] sm:$0xff]
        %v499 = vld [vmem:[%s485 + $0x68] sm:$0xff]
        %v500 = vld [vmem:[%s485 + $0x70] sm:$0xff]
        %v501 = vld [vmem:[%s485 + $0x78] sm:$0xff]
        %502 = vmatprep.subr.mxu0 %v487
        %503 = vmatpush1.msra.mxu0 %v486
        %504 = vmatprep.subr.mxu0 %v489
        %505 = vmatpush1.msra.mxu0 %v488
        %506 = vmatprep.subr.mxu0 %v491
        %507 = vmatpush1.msra.mxu0 %v490
        %508 = vmatprep.subr.mxu0 %v493
        %509 = vmatpush1.msra.mxu0 %v492
        %510 = vmatprep.subr.mxu0 %v495
        %511 = vmatpush1.msra.mxu0 %v494
        %512 = vmatprep.subr.mxu0 %v497
        %513 = vmatpush1.msra.mxu0 %v496
        %514 = vmatprep.subr.mxu0 %v499
        %515 = vmatpush1.msra.mxu0 %v498
        %516 = vmatprep.subr.mxu0 %v501
        %517 = vmatpush1.msra.mxu0 %v500
        %518 = vmatprep.subr.mxu0 0.0
        %519 = vmatpush1.msra.mxu0 0.0
        %520 = vmatprep.subr.mxu0 0.0
        %521 = vmatpush1.msra.mxu0 0.0
        %522 = vmatprep.subr.mxu0 0.0
        %523 = vmatpush1.msra.mxu0 0.0
        %524 = vmatprep.subr.mxu0 0.0
        %525 = vmatpush1.msra.mxu0 0.0
        %526 = vmatprep.subr.mxu0 0.0
        %527 = vmatpush1.msra.mxu0 0.0
        %528 = vmatprep.subr.mxu0 0.0
        %529 = vmatpush1.msra.mxu0 0.0
        %530 = vmatprep.subr.mxu0 0.0
        %531 = vmatpush1.msra.mxu0 0.0
        %532 = vmatprep.subr.mxu0 0.0
        %533 = vmatpush1.msra.mxu0 0.0
        %534 = vmatprep.subr.mxu0 0.0
        %535 = vmatpush1.msra.mxu0 0.0
        %536 = vmatprep.subr.mxu0 0.0
        %537 = vmatpush1.msra.mxu0 0.0
        %538 = vmatprep.subr.mxu0 0.0
        %539 = vmatpush1.msra.mxu0 0.0
        %540 = vmatprep.subr.mxu0 0.0
        %541 = vmatpush1.msra.mxu0 0.0
        %542 = vmatprep.subr.mxu0 0.0
        %543 = vmatpush1.msra.mxu0 0.0
        %544 = vmatprep.subr.mxu0 0.0
        %545 = vmatpush1.msra.mxu0 0.0
        %546 = vmatprep.subr.mxu0 0.0
        %547 = vmatpush1.msra.mxu0 0.0
        %548 = vmatprep.subr.mxu0 0.0
        %549 = vmatpush1.msra.mxu0 0.0
        %550 = vmatprep.subr.mxu0 0.0
        %551 = vmatpush1.msra.mxu0 0.0
        %552 = vmatprep.subr.mxu0 0.0
        %553 = vmatpush1.msra.mxu0 0.0
        %554 = vmatprep.subr.mxu0 0.0
        %555 = vmatpush1.msra.mxu0 0.0
        %556 = vmatprep.subr.mxu0 0.0
        %557 = vmatpush1.msra.mxu0 0.0
        %558 = vmatprep.subr.mxu0 0.0
        %559 = vmatpush1.msra.mxu0 0.0
        %560 = vmatprep.subr.mxu0 0.0
        %561 = vmatpush1.msra.mxu0 0.0
        %562 = vmatprep.subr.mxu0 0.0
        %563 = vmatpush1.msra.mxu0 0.0
        %564 = vmatprep.subr.mxu0 0.0
        %565 = vmatpush1.msra.mxu0 0.0
        %566 = vmatprep.mubr.f32.mxu0 0.0
        %567 = vmatmul.mubr.f32.gmra.mrb[0].mxu0 %v408
        %v568 = vpop.f32.mrb[0].mxu0
        %v569 = vadd.f32 %v404, %v568
        %v570 = vpop.f32.mrb[0].mxu0
        %v571 = vadd.f32 %v404, %v570
        %572 = vdwg.mxu0
        %v573 = vmax.f32 %v569, 0.0
        %v574 = vmax.f32 %v571, 0.0
        %575 = vst [vmem:[#allocation2 + $0x18] sm:$0xff] %v573
        %576 = vst [vmem:[#allocation2 + $0x20] sm:$0xff] %v574
        %v577 = vld [vmem:[#allocation2] sm:$0xff]
        %v578 = vld [vmem:[#allocation2 + $0x8] sm:$0xff]
        %v579 = vld [vmem:[#allocation2 + $0x10] sm:$0xff]
        %v580 = vld [vmem:[#allocation2 + $0x18] sm:$0xff]
        %v581 = vld [vmem:[#allocation2 + $0x20] sm:$0xff]
        %v582 = vld [vmem:[%s5] ss:$8 sm:$0xf]
        %v584 = vlaneseq
        %v585 = vshrl.u32 %v584, 7
        %v586 = vsub.s32 0, %v585
        %v587 = vrot.slane %v582, %v586
        %v588 = vlaneseq
        %v589 = vshrl.u32 %v588, 7
        %v590 = vsub.s32 1, %v589
        %v591 = vrot.slane %v582, %v590
        %v592 = vlaneseq
        %v593 = vshrl.u32 %v592, 7
        %v594 = vsub.s32 2, %v593
        %v595 = vrot.slane %v582, %v594
        %v596 = vlaneseq
        %v597 = vshrl.u32 %v596, 7
        %v598 = vsub.s32 3, %v597
        %v599 = vrot.slane %v582, %v598
        %600 = vrot.lane.b32.xlu0 %v587, 111
        %v601 = vpop.permute.xlu0 %600
        %602 = vrot.lane.b32.xlu0 %v591, 111
        %v603 = vpop.permute.xlu0 %602
        %604 = vrot.lane.b32.xlu0 %v595, 111
        %v605 = vpop.permute.xlu0 %604
        %606 = vrot.lane.b32.xlu0 %v599, 111
        %v607 = vpop.permute.xlu0 %606
        %vm608 = vcmask 908288
        %v609 = vsel %vm608, %v601, %v603
        %v610 = vsel %vm608, %v603, %v605
        %v611 = vsel %vm608, %v605, %v607
        %v617 = vmul.f32 %v577, %v601
        %v618 = vmul.f32 %v578, %v609
        %v619 = vmul.f32 %v579, %v610
        %v620 = vmul.f32 %v580, %v611
        %v621 = vmul.f32 %v581, %v607
        %627 = vrot.lane.b32.xlu0 %v617, 17
        %v628 = vpop.permute.xlu0 %627
        %629 = vrot.lane.b32.xlu0 %v618, 17
        %v630 = vpop.permute.xlu0 %629
        %631 = vrot.lane.b32.xlu0 %v619, 17
        %v632 = vpop.permute.xlu0 %631
        %633 = vrot.lane.b32.xlu0 %v620, 17
        %v634 = vpop.permute.xlu0 %633
        %635 = vrot.lane.b32.xlu0 %v621, 17
        %v636 = vpop.permute.xlu0 %635
        %vm637 = vcmask 138240
        %v638 = vsel %vm637, %v628, %v630
        %v639 = vsel %vm637, %v630, %v632
        %v640 = vsel %vm637, %v632, %v634
        %v641 = vsel %vm637, %v634, %v636
        %646 = vst [vmem:[#allocation3] sm:$0xff] %v638
        %647 = vst [vmem:[#allocation3 + $0x8] sm:$0xff] %v639
        %648 = vst [vmem:[#allocation3 + $0x10] sm:$0xff] %v640
        %649 = vst [vmem:[#allocation3 + $0x18] sm:$0xff] %v641
        %v650 = vld [vmem:[#allocation2] sm:$0xff]
        %v651 = vld [vmem:[#allocation2 + $0x8] sm:$0xff]
        %v652 = vld [vmem:[#allocation2 + $0x10] sm:$0xff]
        %v653 = vld [vmem:[#allocation2 + $0x18] sm:$0xff]
        %v654 = vld [vmem:[#allocation2 + $0x20] sm:$0xff]
        %s655 = scalar_lea.vmem %s5, 1
        %v656 = vld [vmem:[%s655] ss:$8 sm:$0xf]
        %v658 = vlaneseq
        %v659 = vshrl.u32 %v658, 7
        %v660 = vsub.s32 0, %v659
        %v661 = vrot.slane %v656, %v660
        %v662 = vlaneseq
        %v663 = vshrl.u32 %v662, 7
        %v664 = vsub.s32 1, %v663
        %v665 = vrot.slane %v656, %v664
        %v666 = vlaneseq
        %v667 = vshrl.u32 %v666, 7
        %v668 = vsub.s32 2, %v667
        %v669 = vrot.slane %v656, %v668
        %v670 = vlaneseq
        %v671 = vshrl.u32 %v670, 7
        %v672 = vsub.s32 3, %v671
        %v673 = vrot.slane %v656, %v672
        %674 = vrot.lane.b32.xlu0 %v661, 112
        %v675 = vpop.permute.xlu0 %674
        %676 = vrot.lane.b32.xlu0 %v665, 112
        %v677 = vpop.permute.xlu0 %676
        %678 = vrot.lane.b32.xlu0 %v669, 112
        %v679 = vpop.permute.xlu0 %678
        %680 = vrot.lane.b32.xlu0 %v673, 112
        %v681 = vpop.permute.xlu0 %680
        %vm682 = vcmask 916480
        %v683 = vsel %vm682, %v675, %v677
        %v684 = vsel %vm682, %v677, %v679
        %v685 = vsel %vm682, %v679, %v681
        %v691 = vmul.f32 %v650, %v675
        %v692 = vmul.f32 %v651, %v683
        %v693 = vmul.f32 %v652, %v684
        %v694 = vmul.f32 %v653, %v685
        %v695 = vmul.f32 %v654, %v681
        %701 = vrot.lane.b32.xlu0 %v691, 16
        %v702 = vpop.permute.xlu0 %701
        %703 = vrot.lane.b32.xlu0 %v692, 16
        %v704 = vpop.permute.xlu0 %703
        %705 = vrot.lane.b32.xlu0 %v693, 16
        %v706 = vpop.permute.xlu0 %705
        %707 = vrot.lane.b32.xlu0 %v694, 16
        %v708 = vpop.permute.xlu0 %707
        %709 = vrot.lane.b32.xlu0 %v695, 16
        %v710 = vpop.permute.xlu0 %709
        %vm711 = vcmask 130048
        %v712 = vsel %vm711, %v702, %v704
        %v713 = vsel %vm711, %v704, %v706
        %v714 = vsel %vm711, %v706, %v708
        %v715 = vsel %vm711, %v708, %v710
        %720 = vst [vmem:[#allocation3 + $0x20] sm:$0xff] %v712
        %721 = vst [vmem:[#allocation3 + $0x28] sm:$0xff] %v713
        %722 = vst [vmem:[#allocation3 + $0x30] sm:$0xff] %v714
        %723 = vst [vmem:[#allocation3 + $0x38] sm:$0xff] %v715
        %v724 = vld [vmem:[#allocation2] sm:$0xff]
        %v725 = vld [vmem:[#allocation2 + $0x8] sm:$0xff]
        %v726 = vld [vmem:[#allocation2 + $0x10] sm:$0xff]
        %v727 = vld [vmem:[#allocation2 + $0x18] sm:$0xff]
        %v728 = vld [vmem:[#allocation2 + $0x20] sm:$0xff]
        %s729 = scalar_lea.vmem %s5, 2
        %v730 = vld [vmem:[%s729] ss:$8 sm:$0xf]
        %v732 = vlaneseq
        %v733 = vshrl.u32 %v732, 7
        %v734 = vsub.s32 0, %v733
        %v735 = vrot.slane %v730, %v734
        %v736 = vlaneseq
        %v737 = vshrl.u32 %v736, 7
        %v738 = vsub.s32 1, %v737
        %v739 = vrot.slane %v730, %v738
        %v740 = vlaneseq
        %v741 = vshrl.u32 %v740, 7
        %v742 = vsub.s32 2, %v741
        %v743 = vrot.slane %v730, %v742
        %v744 = vlaneseq
        %v745 = vshrl.u32 %v744, 7
        %v746 = vsub.s32 3, %v745
        %v747 = vrot.slane %v730, %v746
        %748 = vrot.lane.b32.xlu0 %v735, 113
        %v749 = vpop.permute.xlu0 %748
        %750 = vrot.lane.b32.xlu0 %v739, 113
        %v751 = vpop.permute.xlu0 %750
        %752 = vrot.lane.b32.xlu0 %v743, 113
        %v753 = vpop.permute.xlu0 %752
        %754 = vrot.lane.b32.xlu0 %v747, 113
        %v755 = vpop.permute.xlu0 %754
        %vm756 = vcmask 924672
        %v757 = vsel %vm756, %v749, %v751
        %v758 = vsel %vm756, %v751, %v753
        %v759 = vsel %vm756, %v753, %v755
        %v765 = vmul.f32 %v724, %v749
        %v766 = vmul.f32 %v725, %v757
        %v767 = vmul.f32 %v726, %v758
        %v768 = vmul.f32 %v727, %v759
        %v769 = vmul.f32 %v728, %v755
        %775 = vrot.lane.b32.xlu0 %v765, 15
        %v776 = vpop.permute.xlu0 %775
        %777 = vrot.lane.b32.xlu0 %v766, 15
        %v778 = vpop.permute.xlu0 %777
        %779 = vrot.lane.b32.xlu0 %v767, 15
        %v780 = vpop.permute.xlu0 %779
        %781 = vrot.lane.b32.xlu0 %v768, 15
        %v782 = vpop.permute.xlu0 %781
        %783 = vrot.lane.b32.xlu0 %v769, 15
        %v784 = vpop.permute.xlu0 %783
        %vm785 = vcmask 121856
        %v786 = vsel %vm785, %v776, %v778
        %v787 = vsel %vm785, %v778, %v780
        %v788 = vsel %vm785, %v780, %v782
        %v789 = vsel %vm785, %v782, %v784
        %794 = vst [vmem:[#allocation3 + $0x40] sm:$0xff] %v786
        %795 = vst [vmem:[#allocation3 + $0x48] sm:$0xff] %v787
        %796 = vst [vmem:[#allocation3 + $0x50] sm:$0xff] %v788
        %797 = vst [vmem:[#allocation3 + $0x58] sm:$0xff] %v789
        %v798 = vld [vmem:[#allocation2] sm:$0xff]
        %v799 = vld [vmem:[#allocation2 + $0x8] sm:$0xff]
        %v800 = vld [vmem:[#allocation2 + $0x10] sm:$0xff]
        %v801 = vld [vmem:[#allocation2 + $0x18] sm:$0xff]
        %v802 = vld [vmem:[#allocation2 + $0x20] sm:$0xff]
        %s803 = scalar_lea.vmem %s5, 3
        %v804 = vld [vmem:[%s803] ss:$8 sm:$0xf]
        %v806 = vlaneseq
        %v807 = vshrl.u32 %v806, 7
        %v808 = vsub.s32 0, %v807
        %v809 = vrot.slane %v804, %v808
        %v810 = vlaneseq
        %v811 = vshrl.u32 %v810, 7
        %v812 = vsub.s32 1, %v811
        %v813 = vrot.slane %v804, %v812
        %v814 = vlaneseq
        %v815 = vshrl.u32 %v814, 7
        %v816 = vsub.s32 2, %v815
        %v817 = vrot.slane %v804, %v816
        %v818 = vlaneseq
        %v819 = vshrl.u32 %v818, 7
        %v820 = vsub.s32 3, %v819
        %v821 = vrot.slane %v804, %v820
        %822 = vrot.lane.b32.xlu0 %v809, 127
        %v823 = vpop.permute.xlu0 %822
        %824 = vrot.lane.b32.xlu0 %v813, 127
        %v825 = vpop.permute.xlu0 %824
        %826 = vrot.lane.b32.xlu0 %v817, 127
        %v827 = vpop.permute.xlu0 %826
        %828 = vrot.lane.b32.xlu0 %v821, 127
        %v829 = vpop.permute.xlu0 %828
        %vm830 = vcmask 1039360
        %v831 = vsel %vm830, %v823, %v825
        %v832 = vsel %vm830, %v825, %v827
        %v833 = vsel %vm830, %v827, %v829
        %v839 = vmul.f32 %v798, %v823
        %v840 = vmul.f32 %v799, %v831
        %v841 = vmul.f32 %v800, %v832
        %v842 = vmul.f32 %v801, %v833
        %v843 = vmul.f32 %v802, %v829
        %849 = vrot.lane.b32.xlu0 %v839, 1
        %v850 = vpop.permute.xlu0 %849
        %851 = vrot.lane.b32.xlu0 %v840, 1
        %v852 = vpop.permute.xlu0 %851
        %853 = vrot.lane.b32.xlu0 %v841, 1
        %v854 = vpop.permute.xlu0 %853
        %855 = vrot.lane.b32.xlu0 %v842, 1
        %v856 = vpop.permute.xlu0 %855
        %857 = vrot.lane.b32.xlu0 %v843, 1
        %v858 = vpop.permute.xlu0 %857
        %vm859 = vcmask 7168
        %v860 = vsel %vm859, %v850, %v852
        %v861 = vsel %vm859, %v852, %v854
        %v862 = vsel %vm859, %v854, %v856
        %v863 = vsel %vm859, %v856, %v858
        %868 = vst [vmem:[#allocation3 + $0x60] sm:$0xff] %v860
        %869 = vst [vmem:[#allocation3 + $0x68] sm:$0xff] %v861
        %870 = vst [vmem:[#allocation3 + $0x70] sm:$0xff] %v862
        %871 = vst [vmem:[#allocation3 + $0x78] sm:$0xff] %v863
        %v872 = vld [vmem:[#allocation2 + $0x8] sm:$0xff]
        %v873 = vld [vmem:[#allocation2 + $0x10] sm:$0xff]
        %v874 = vld [vmem:[#allocation2 + $0x18] sm:$0xff]
        %v875 = vld [vmem:[#allocation2 + $0x20] sm:$0xff]
        %s876 = scalar_lea.vmem %s5, 4
        %v877 = vld [vmem:[%s876] ss:$8 sm:$0xf]
        %v879 = vlaneseq
        %v880 = vshrl.u32 %v879, 7
        %v881 = vsub.s32 0, %v880
        %v882 = vrot.slane %v877, %v881
        %v883 = vlaneseq
        %v884 = vshrl.u32 %v883, 7
        %v885 = vsub.s32 1, %v884
        %v886 = vrot.slane %v877, %v885
        %v887 = vlaneseq
        %v888 = vshrl.u32 %v887, 7
        %v889 = vsub.s32 2, %v888
        %v890 = vrot.slane %v877, %v889
        %v891 = vlaneseq
        %v892 = vshrl.u32 %v891, 7
        %v893 = vsub.s32 3, %v892
        %v894 = vrot.slane %v877, %v893
        %v899 = vmul.f32 %v872, %v882
        %v900 = vmul.f32 %v873, %v886
        %v901 = vmul.f32 %v874, %v890
        %v902 = vmul.f32 %v875, %v894
        %903 = vst [vmem:[#allocation3 + $0x80] sm:$0xff] %v899
        %904 = vst [vmem:[#allocation3 + $0x88] sm:$0xff] %v900
        %905 = vst [vmem:[#allocation3 + $0x90] sm:$0xff] %v901
        %906 = vst [vmem:[#allocation3 + $0x98] sm:$0xff] %v902
        %v907 = vld [vmem:[#allocation2 + $0x8] sm:$0xff]
        %v908 = vld [vmem:[#allocation2 + $0x10] sm:$0xff]
        %v909 = vld [vmem:[#allocation2 + $0x18] sm:$0xff]
        %v910 = vld [vmem:[#allocation2 + $0x20] sm:$0xff]
        %v911 = vld [vmem:[#allocation2 + $0x28] sm:$0xff]
        %s912 = scalar_lea.vmem %s5, 5
        %v913 = vld [vmem:[%s912] ss:$8 sm:$0xf]
        %v915 = vlaneseq
        %v916 = vshrl.u32 %v915, 7
        %v917 = vsub.s32 0, %v916
        %v918 = vrot.slane %v913, %v917
        %v919 = vlaneseq
        %v920 = vshrl.u32 %v919, 7
        %v921 = vsub.s32 1, %v920
        %v922 = vrot.slane %v913, %v921
        %v923 = vlaneseq
        %v924 = vshrl.u32 %v923, 7
        %v925 = vsub.s32 2, %v924
        %v926 = vrot.slane %v913, %v925
        %v927 = vlaneseq
        %v928 = vshrl.u32 %v927, 7
        %v929 = vsub.s32 3, %v928
        %v930 = vrot.slane %v913, %v929
        %931 = vrot.lane.b32.xlu0 %v918, 1
        %v932 = vpop.permute.xlu0 %931
        %933 = vrot.lane.b32.xlu0 %v922, 1
        %v934 = vpop.permute.xlu0 %933
        %935 = vrot.lane.b32.xlu0 %v926, 1
        %v936 = vpop.permute.xlu0 %935
        %937 = vrot.lane.b32.xlu0 %v930, 1
        %v938 = vpop.permute.xlu0 %937
        %v939 = vsel %vm859, %v932, %v934
        %v940 = vsel %vm859, %v934, %v936
        %v941 = vsel %vm859, %v936, %v938
        %v947 = vmul.f32 %v907, %v932
        %v948 = vmul.f32 %v908, %v939
        %v949 = vmul.f32 %v909, %v940
        %v950 = vmul.f32 %v910, %v941
        %v951 = vmul.f32 %v911, %v938
        %957 = vrot.lane.b32.xlu0 %v947, 127
        %v958 = vpop.permute.xlu0 %957
        %959 = vrot.lane.b32.xlu0 %v948, 127
        %v960 = vpop.permute.xlu0 %959
        %961 = vrot.lane.b32.xlu0 %v949, 127
        %v962 = vpop.permute.xlu0 %961
        %963 = vrot.lane.b32.xlu0 %v950, 127
        %v964 = vpop.permute.xlu0 %963
        %965 = vrot.lane.b32.xlu0 %v951, 127
        %v966 = vpop.permute.xlu0 %965
        %v967 = vsel %vm830, %v958, %v960
        %v968 = vsel %vm830, %v960, %v962
        %v969 = vsel %vm830, %v962, %v964
        %v970 = vsel %vm830, %v964, %v966
        %975 = vst [vmem:[#allocation3 + $0xa0] sm:$0xff] %v967
        %976 = vst [vmem:[#allocation3 + $0xa8] sm:$0xff] %v968
        %977 = vst [vmem:[#allocation3 + $0xb0] sm:$0xff] %v969
        %978 = vst [vmem:[#allocation3 + $0xb8] sm:$0xff] %v970
        %v979 = vld [vmem:[#allocation2 + $0x8] sm:$0xff]
        %v980 = vld [vmem:[#allocation2 + $0x10] sm:$0xff]
        %v981 = vld [vmem:[#allocation2 + $0x18] sm:$0xff]
        %v982 = vld [vmem:[#allocation2 + $0x20] sm:$0xff]
        %v983 = vld [vmem:[#allocation2 + $0x28] sm:$0xff]
        %s984 = scalar_lea.vmem %s5, 6
        %v985 = vld [vmem:[%s984] ss:$8 sm:$0xf]
        %v987 = vlaneseq
        %v988 = vshrl.u32 %v987, 7
        %v989 = vsub.s32 0, %v988
        %v990 = vrot.slane %v985, %v989
        %v991 = vlaneseq
        %v992 = vshrl.u32 %v991, 7
        %v993 = vsub.s32 1, %v992
        %v994 = vrot.slane %v985, %v993
        %v995 = vlaneseq
        %v996 = vshrl.u32 %v995, 7
        %v997 = vsub.s32 2, %v996
        %v998 = vrot.slane %v985, %v997
        %v999 = vlaneseq
        %v1000 = vshrl.u32 %v999, 7
        %v1001 = vsub.s32 3, %v1000
        %v1002 = vrot.slane %v985, %v1001
        %1003 = vrot.lane.b32.xlu0 %v990, 15
        %v1004 = vpop.permute.xlu0 %1003
        %1005 = vrot.lane.b32.xlu0 %v994, 15
        %v1006 = vpop.permute.xlu0 %1005
        %1007 = vrot.lane.b32.xlu0 %v998, 15
        %v1008 = vpop.permute.xlu0 %1007
        %1009 = vrot.lane.b32.xlu0 %v1002, 15
        %v1010 = vpop.permute.xlu0 %1009
        %v1011 = vsel %vm785, %v1004, %v1006
        %v1012 = vsel %vm785, %v1006, %v1008
        %v1013 = vsel %vm785, %v1008, %v1010
        %v1019 = vmul.f32 %v979, %v1004
        %v1020 = vmul.f32 %v980, %v1011
        %v1021 = vmul.f32 %v981, %v1012
        %v1022 = vmul.f32 %v982, %v1013
        %v1023 = vmul.f32 %v983, %v1010
        %1029 = vrot.lane.b32.xlu0 %v1019, 113
        %v1030 = vpop.permute.xlu0 %1029
        %1031 = vrot.lane.b32.xlu0 %v1020, 113
        %v1032 = vpop.permute.xlu0 %1031
        %1033 = vrot.lane.b32.xlu0 %v1021, 113
        %v1034 = vpop.permute.xlu0 %1033
        %1035 = vrot.lane.b32.xlu0 %v1022, 113
        %v1036 = vpop.permute.xlu0 %1035
        %1037 = vrot.lane.b32.xlu0 %v1023, 113
        %v1038 = vpop.permute.xlu0 %1037
        %v1039 = vsel %vm756, %v1030, %v1032
        %v1040 = vsel %vm756, %v1032, %v1034
        %v1041 = vsel %vm756, %v1034, %v1036
        %v1042 = vsel %vm756, %v1036, %v1038
        %1047 = vst [vmem:[#allocation3 + $0xc0] sm:$0xff] %v1039
        %1048 = vst [vmem:[#allocation3 + $0xc8] sm:$0xff] %v1040
        %1049 = vst [vmem:[#allocation3 + $0xd0] sm:$0xff] %v1041
        %1050 = vst [vmem:[#allocation3 + $0xd8] sm:$0xff] %v1042
        %v1051 = vld [vmem:[#allocation2 + $0x8] sm:$0xff]
        %v1052 = vld [vmem:[#allocation2 + $0x10] sm:$0xff]
        %v1053 = vld [vmem:[#allocation2 + $0x18] sm:$0xff]
        %v1054 = vld [vmem:[#allocation2 + $0x20] sm:$0xff]
        %v1055 = vld [vmem:[#allocation2 + $0x28] sm:$0xff]
        %s1056 = scalar_lea.vmem %s5, 7
        %v1057 = vld [vmem:[%s1056] ss:$8 sm:$0xf]
        %v1059 = vlaneseq
        %v1060 = vshrl.u32 %v1059, 7
        %v1061 = vsub.s32 0, %v1060
        %v1062 = vrot.slane %v1057, %v1061
        %v1063 = vlaneseq
        %v1064 = vshrl.u32 %v1063, 7
        %v1065 = vsub.s32 1, %v1064
        %v1066 = vrot.slane %v1057, %v1065
        %v1067 = vlaneseq
        %v1068 = vshrl.u32 %v1067, 7
        %v1069 = vsub.s32 2, %v1068
        %v1070 = vrot.slane %v1057, %v1069
        %v1071 = vlaneseq
        %v1072 = vshrl.u32 %v1071, 7
        %v1073 = vsub.s32 3, %v1072
        %v1074 = vrot.slane %v1057, %v1073
        %1075 = vrot.lane.b32.xlu0 %v1062, 16
        %v1076 = vpop.permute.xlu0 %1075
        %1077 = vrot.lane.b32.xlu0 %v1066, 16
        %v1078 = vpop.permute.xlu0 %1077
        %1079 = vrot.lane.b32.xlu0 %v1070, 16
        %v1080 = vpop.permute.xlu0 %1079
        %1081 = vrot.lane.b32.xlu0 %v1074, 16
        %v1082 = vpop.permute.xlu0 %1081
        %v1083 = vsel %vm711, %v1076, %v1078
        %v1084 = vsel %vm711, %v1078, %v1080
        %v1085 = vsel %vm711, %v1080, %v1082
        %v1091 = vmul.f32 %v1051, %v1076
        %v1092 = vmul.f32 %v1052, %v1083
        %v1093 = vmul.f32 %v1053, %v1084
        %v1094 = vmul.f32 %v1054, %v1085
        %v1095 = vmul.f32 %v1055, %v1082
        %1101 = vrot.lane.b32.xlu0 %v1091, 112
        %v1102 = vpop.permute.xlu0 %1101
        %1103 = vrot.lane.b32.xlu0 %v1092, 112
        %v1104 = vpop.permute.xlu0 %1103
        %1105 = vrot.lane.b32.xlu0 %v1093, 112
        %v1106 = vpop.permute.xlu0 %1105
        %1107 = vrot.lane.b32.xlu0 %v1094, 112
        %v1108 = vpop.permute.xlu0 %1107
        %1109 = vrot.lane.b32.xlu0 %v1095, 112
        %v1110 = vpop.permute.xlu0 %1109
        %v1111 = vsel %vm682, %v1102, %v1104
        %v1112 = vsel %vm682, %v1104, %v1106
        %v1113 = vsel %vm682, %v1106, %v1108
        %v1114 = vsel %vm682, %v1108, %v1110
        %1119 = vst [vmem:[#allocation3 + $0xe0] sm:$0xff] %v1111
        %1120 = vst [vmem:[#allocation3 + $0xe8] sm:$0xff] %v1112
        %1121 = vst [vmem:[#allocation3 + $0xf0] sm:$0xff] %v1113
        %1122 = vst [vmem:[#allocation3 + $0xf8] sm:$0xff] %v1114
        %v1123 = vld [vmem:[#allocation2 + $0x8] sm:$0xff]
        %v1124 = vld [vmem:[#allocation2 + $0x10] sm:$0xff]
        %v1125 = vld [vmem:[#allocation2 + $0x18] sm:$0xff]
        %v1126 = vld [vmem:[#allocation2 + $0x20] sm:$0xff]
        %v1127 = vld [vmem:[#allocation2 + $0x28] sm:$0xff]
        %s1128 = scalar_lea.vmem %s5, 32
        %v1129 = vld [vmem:[%s1128] ss:$8 sm:$0xf]
        %v1131 = vlaneseq
        %v1132 = vshrl.u32 %v1131, 7
        %v1133 = vsub.s32 0, %v1132
        %v1134 = vrot.slane %v1129, %v1133
        %v1135 = vlaneseq
        %v1136 = vshrl.u32 %v1135, 7
        %v1137 = vsub.s32 1, %v1136
        %v1138 = vrot.slane %v1129, %v1137
        %v1139 = vlaneseq
        %v1140 = vshrl.u32 %v1139, 7
        %v1141 = vsub.s32 2, %v1140
        %v1142 = vrot.slane %v1129, %v1141
        %v1143 = vlaneseq
        %v1144 = vshrl.u32 %v1143, 7
        %v1145 = vsub.s32 3, %v1144
        %v1146 = vrot.slane %v1129, %v1145
        %1147 = vrot.lane.b32.xlu0 %v1134, 17
        %v1148 = vpop.permute.xlu0 %1147
        %1149 = vrot.lane.b32.xlu0 %v1138, 17
        %v1150 = vpop.permute.xlu0 %1149
        %1151 = vrot.lane.b32.xlu0 %v1142, 17
        %v1152 = vpop.permute.xlu0 %1151
        %1153 = vrot.lane.b32.xlu0 %v1146, 17
        %v1154 = vpop.permute.xlu0 %1153
        %v1155 = vsel %vm637, %v1148, %v1150
        %v1156 = vsel %vm637, %v1150, %v1152
        %v1157 = vsel %vm637, %v1152, %v1154
        %v1163 = vmul.f32 %v1123, %v1148
        %v1164 = vmul.f32 %v1124, %v1155
        %v1165 = vmul.f32 %v1125, %v1156
        %v1166 = vmul.f32 %v1126, %v1157
        %v1167 = vmul.f32 %v1127, %v1154
        %1173 = vrot.lane.b32.xlu0 %v1163, 111
        %v1174 = vpop.permute.xlu0 %1173
        %1175 = vrot.lane.b32.xlu0 %v1164, 111
        %v1176 = vpop.permute.xlu0 %1175
        %1177 = vrot.lane.b32.xlu0 %v1165, 111
        %v1178 = vpop.permute.xlu0 %1177
        %1179 = vrot.lane.b32.xlu0 %v1166, 111
        %v1180 = vpop.permute.xlu0 %1179
        %1181 = vrot.lane.b32.xlu0 %v1167, 111
        %v1182 = vpop.permute.xlu0 %1181
        %v1183 = vsel %vm608, %v1174, %v1176
        %v1184 = vsel %vm608, %v1176, %v1178
        %v1185 = vsel %vm608, %v1178, %v1180
        %v1186 = vsel %vm608, %v1180, %v1182
        %1191 = vst [vmem:[#allocation3 + $0x100] sm:$0xff] %v1183
        %1192 = vst [vmem:[#allocation3 + $0x108] sm:$0xff] %v1184
        %1193 = vst [vmem:[#allocation3 + $0x110] sm:$0xff] %v1185
        %1194 = vst [vmem:[#allocation3 + $0x118] sm:$0xff] %v1186
        %v1195 = vld [vmem:[#allocation3] sm:$0xff]
        %v1196 = vld [vmem:[#allocation3 + $0x8] sm:$0xff]
        %v1197 = vld [vmem:[#allocation3 + $0x20] sm:$0xff]
        %v1198 = vld [vmem:[#allocation3 + $0x28] sm:$0xff]
        %v1199 = vld [vmem:[#allocation3 + $0x40] sm:$0xff]
        %v1200 = vld [vmem:[#allocation3 + $0x48] sm:$0xff]
        %v1201 = vld [vmem:[#allocation3 + $0x60] sm:$0xff]
        %v1202 = vld [vmem:[#allocation3 + $0x68] sm:$0xff]
        %v1203 = vld [vmem:[#allocation3 + $0x80] sm:$0xff]
        %v1204 = vld [vmem:[#allocation3 + $0x88] sm:$0xff]
        %v1205 = vld [vmem:[#allocation3 + $0xa0] sm:$0xff]
        %v1206 = vld [vmem:[#allocation3 + $0xa8] sm:$0xff]
        %v1207 = vld [vmem:[#allocation3 + $0xc0] sm:$0xff]
        %v1208 = vld [vmem:[#allocation3 + $0xc8] sm:$0xff]
        %v1209 = vld [vmem:[#allocation3 + $0xe0] sm:$0xff]
        %v1210 = vld [vmem:[#allocation3 + $0xe8] sm:$0xff]
        %v1211 = vld [vmem:[#allocation3 + $0x100] sm:$0xff]
        %v1212 = vld [vmem:[#allocation3 + $0x108] sm:$0xff]
        %1214 = vset.pattern.permute.xlu0 0
        %1215 = vperm.xlu0 %1214, %v375
        %v1216 = vpop.permute.xlu0 %1215
        %1219 = vset.pattern.permute.xlu0 0
        %1220 = vperm.xlu0 %1219, %v376
        %v1221 = vpop.permute.xlu0 %1220
        %1224 = vset.pattern.permute.xlu0 0
        %1225 = vperm.xlu0 %1224, %v377
        %v1226 = vpop.permute.xlu0 %1225
        %1229 = vset.pattern.permute.xlu0 0
        %1230 = vperm.xlu0 %1229, %v378
        %v1231 = vpop.permute.xlu0 %1230
        %1234 = vset.pattern.permute.xlu0 0
        %1235 = vperm.xlu0 %1234, %v379
        %v1236 = vpop.permute.xlu0 %1235
        %1239 = vset.pattern.permute.xlu0 0
        %1240 = vperm.xlu0 %1239, %v380
        %v1241 = vpop.permute.xlu0 %1240
        %1244 = vset.pattern.permute.xlu0 0
        %1245 = vperm.xlu0 %1244, %v381
        %v1246 = vpop.permute.xlu0 %1245
        %1249 = vset.pattern.permute.xlu0 0
        %1250 = vperm.xlu0 %1249, %v382
        %v1251 = vpop.permute.xlu0 %1250
        %vm1253 = vcmask 588800
        %v1255 = vsel %vm1253, %v367, 0
        %v1258 = vsel %vm1253, %v368, 0
        %v1261 = vsel %vm1253, %v369, 0
        %v1264 = vsel %vm1253, %v370, 0
        %v1267 = vsel %vm1253, %v371, 0
        %v1270 = vsel %vm1253, %v372, 0
        %v1273 = vsel %vm1253, %v373, 0
        %v1276 = vsel %vm1253, %v374, 0
        %1278 = vmatprep.subr.mxu0 %v1196
        %1279 = vmatpush1.msra.mxu0 %v1195
        %1280 = vmatprep.subr.mxu0 %v1198
        %1281 = vmatpush1.msra.mxu0 %v1197
        %1282 = vmatprep.subr.mxu0 %v1200
        %1283 = vmatpush1.msra.mxu0 %v1199
        %1284 = vmatprep.subr.mxu0 %v1202
        %1285 = vmatpush1.msra.mxu0 %v1201
        %1286 = vmatprep.subr.mxu0 %v1204
        %1287 = vmatpush1.msra.mxu0 %v1203
        %1288 = vmatprep.subr.mxu0 %v1206
        %1289 = vmatpush1.msra.mxu0 %v1205
        %1290 = vmatprep.subr.mxu0 %v1208
        %1291 = vmatpush1.msra.mxu0 %v1207
        %1292 = vmatprep.subr.mxu0 %v1210
        %1293 = vmatpush1.msra.mxu0 %v1209
        %1294 = vmatprep.subr.mxu0 %v1212
        %1295 = vmatpush1.msra.mxu0 %v1211
        %1296 = vmatprep.subr.mxu0 0.0
        %1297 = vmatpush1.msra.mxu0 0.0
        %1298 = vmatprep.subr.mxu0 0.0
        %1299 = vmatpush1.msra.mxu0 0.0
        %1300 = vmatprep.subr.mxu0 0.0
        %1301 = vmatpush1.msra.mxu0 0.0
        %1302 = vmatprep.subr.mxu0 0.0
        %1303 = vmatpush1.msra.mxu0 0.0
        %1304 = vmatprep.subr.mxu0 0.0
        %1305 = vmatpush1.msra.mxu0 0.0
        %1306 = vmatprep.subr.mxu0 0.0
        %1307 = vmatpush1.msra.mxu0 0.0
        %1308 = vmatprep.subr.mxu0 0.0
        %1309 = vmatpush1.msra.mxu0 0.0
        %1310 = vmatprep.subr.mxu0 0.0
        %1311 = vmatpush1.msra.mxu0 0.0
        %1312 = vmatprep.subr.mxu0 0.0
        %1313 = vmatpush1.msra.mxu0 0.0
        %1314 = vmatprep.subr.mxu0 0.0
        %1315 = vmatpush1.msra.mxu0 0.0
        %1316 = vmatprep.subr.mxu0 0.0
        %1317 = vmatpush1.msra.mxu0 0.0
        %1318 = vmatprep.subr.mxu0 0.0
        %1319 = vmatpush1.msra.mxu0 0.0
        %1320 = vmatprep.subr.mxu0 0.0
        %1321 = vmatpush1.msra.mxu0 0.0
        %1322 = vmatprep.subr.mxu0 0.0
        %1323 = vmatpush1.msra.mxu0 0.0
        %1324 = vmatprep.subr.mxu0 0.0
        %1325 = vmatpush1.msra.mxu0 0.0
        %1326 = vmatprep.subr.mxu0 0.0
        %1327 = vmatpush1.msra.mxu0 0.0
        %1328 = vmatprep.subr.mxu0 0.0
        %1329 = vmatpush1.msra.mxu0 0.0
        %1330 = vmatprep.subr.mxu0 0.0
        %1331 = vmatpush1.msra.mxu0 0.0
        %1332 = vmatprep.subr.mxu0 0.0
        %1333 = vmatpush1.msra.mxu0 0.0
        %1334 = vmatprep.subr.mxu0 0.0
        %1335 = vmatpush1.msra.mxu0 0.0
        %1336 = vmatprep.subr.mxu0 0.0
        %1337 = vmatpush1.msra.mxu0 0.0
        %1338 = vmatprep.subr.mxu0 0.0
        %1339 = vmatpush1.msra.mxu0 0.0
        %1340 = vmatprep.subr.mxu0 0.0
        %1341 = vmatpush1.msra.mxu0 0.0
        %1342 = vmatprep.mubr.f32.mxu0 0.0
        %1343 = vmatmul.mubr.f32.gmra.mrb[0].mxu0 %v1255
        %v1344 = vpop.f32.mrb[0].mxu0
        %v1345 = vadd.f32 %v1216, %v1344
        %v1346 = vpop.f32.mrb[0].mxu0
        %v1347 = vadd.f32 %v1216, %v1346
        %1348 = vmatprep.mubr.f32.mxu0 0.0
        %1349 = vmatmul.mubr.f32.gmra.mrb[0].mxu0 %v1258
        %v1350 = vpop.f32.mrb[0].mxu0
        %v1351 = vadd.f32 %v1221, %v1350
        %v1352 = vpop.f32.mrb[0].mxu0
        %v1353 = vadd.f32 %v1221, %v1352
        %1354 = vmatprep.mubr.f32.mxu0 0.0
        %1355 = vmatmul.mubr.f32.gmra.mrb[0].mxu0 %v1261
        %v1356 = vpop.f32.mrb[0].mxu0
        %v1357 = vadd.f32 %v1226, %v1356
        %v1358 = vpop.f32.mrb[0].mxu0
        %v1359 = vadd.f32 %v1226, %v1358
        %1360 = vmatprep.mubr.f32.mxu0 0.0
        %1361 = vmatmul.mubr.f32.gmra.mrb[0].mxu0 %v1264
        %v1362 = vpop.f32.mrb[0].mxu0
        %v1363 = vadd.f32 %v1231, %v1362
        %v1364 = vpop.f32.mrb[0].mxu0
        %v1365 = vadd.f32 %v1231, %v1364
        %1366 = vmatprep.mubr.f32.mxu0 0.0
        %1367 = vmatmul.mubr.f32.gmra.mrb[0].mxu0 %v1267
        %v1368 = vpop.f32.mrb[0].mxu0
        %v1369 = vadd.f32 %v1236, %v1368
        %v1370 = vpop.f32.mrb[0].mxu0
        %v1371 = vadd.f32 %v1236, %v1370
        %1372 = vmatprep.mubr.f32.mxu0 0.0
        %1373 = vmatmul.mubr.f32.gmra.mrb[0].mxu0 %v1270
        %v1374 = vpop.f32.mrb[0].mxu0
        %v1375 = vadd.f32 %v1241, %v1374
        %v1376 = vpop.f32.mrb[0].mxu0
        %v1377 = vadd.f32 %v1241, %v1376
        %1378 = vmatprep.mubr.f32.mxu0 0.0
        %1379 = vmatmul.mubr.f32.gmra.mrb[0].mxu0 %v1273
        %v1380 = vpop.f32.mrb[0].mxu0
        %v1381 = vadd.f32 %v1246, %v1380
        %v1382 = vpop.f32.mrb[0].mxu0
        %v1383 = vadd.f32 %v1246, %v1382
        %1384 = vmatprep.mubr.f32.mxu0 0.0
        %1385 = vmatmul.mubr.f32.gmra.mrb[0].mxu0 %v1276
        %v1386 = vpop.f32.mrb[0].mxu0
        %v1387 = vadd.f32 %v1251, %v1386
        %v1388 = vpop.f32.mrb[0].mxu0
        %v1389 = vadd.f32 %v1251, %v1388
        %1390 = vdwg.mxu0
        %1391 = vst [vmem:[%s344] sm:$0xff] %v1345
        %1392 = vst [vmem:[%s344 + $0x8] sm:$0xff] %v1347
        %1393 = vst [vmem:[%s344 + $0x10] sm:$0xff] %v1351
        %1394 = vst [vmem:[%s344 + $0x18] sm:$0xff] %v1353
        %1395 = vst [vmem:[%s344 + $0x20] sm:$0xff] %v1357
        %1396 = vst [vmem:[%s344 + $0x28] sm:$0xff] %v1359
        %1397 = vst [vmem:[%s344 + $0x30] sm:$0xff] %v1363
        %1398 = vst [vmem:[%s344 + $0x38] sm:$0xff] %v1365
        %1399 = vst [vmem:[%s344 + $0x40] sm:$0xff] %v1369
        %1400 = vst [vmem:[%s344 + $0x48] sm:$0xff] %v1371
        %1401 = vst [vmem:[%s344 + $0x50] sm:$0xff] %v1375
        %1402 = vst [vmem:[%s344 + $0x58] sm:$0xff] %v1377
        %1403 = vst [vmem:[%s344 + $0x60] sm:$0xff] %v1381
        %1404 = vst [vmem:[%s344 + $0x68] sm:$0xff] %v1383
        %1405 = vst [vmem:[%s344 + $0x70] sm:$0xff] %v1387
        %1406 = vst [vmem:[%s344 + $0x78] sm:$0xff] %v1389
        %v1407 = vld [vmem:[#allocation3 + $0x10] sm:$0xff]
        %v1408 = vld [vmem:[#allocation3 + $0x18] sm:$0xff]
        %v1409 = vld [vmem:[#allocation3 + $0x30] sm:$0xff]
        %v1410 = vld [vmem:[#allocation3 + $0x38] sm:$0xff]
        %v1411 = vld [vmem:[#allocation3 + $0x50] sm:$0xff]
        %v1412 = vld [vmem:[#allocation3 + $0x58] sm:$0xff]
        %v1413 = vld [vmem:[#allocation3 + $0x70] sm:$0xff]
        %v1414 = vld [vmem:[#allocation3 + $0x78] sm:$0xff]
        %v1415 = vld [vmem:[#allocation3 + $0x90] sm:$0xff]
        %v1416 = vld [vmem:[#allocation3 + $0x98] sm:$0xff]
        %v1417 = vld [vmem:[#allocation3 + $0xb0] sm:$0xff]
        %v1418 = vld [vmem:[#allocation3 + $0xb8] sm:$0xff]
        %v1419 = vld [vmem:[#allocation3 + $0xd0] sm:$0xff]
        %v1420 = vld [vmem:[#allocation3 + $0xd8] sm:$0xff]
        %v1421 = vld [vmem:[#allocation3 + $0xf0] sm:$0xff]
        %v1422 = vld [vmem:[#allocation3 + $0xf8] sm:$0xff]
        %v1423 = vld [vmem:[#allocation3 + $0x110] sm:$0xff]
        %v1424 = vld [vmem:[#allocation3 + $0x118] sm:$0xff]
        %1425 = vmatprep.subr.mxu0 %v1408
        %1426 = vmatpush1.msra.mxu0 %v1407
        %1427 = vmatprep.subr.mxu0 %v1410
        %1428 = vmatpush1.msra.mxu0 %v1409
        %1429 = vmatprep.subr.mxu0 %v1412
        %1430 = vmatpush1.msra.mxu0 %v1411
        %1431 = vmatprep.subr.mxu0 %v1414
        %1432 = vmatpush1.msra.mxu0 %v1413
        %1433 = vmatprep.subr.mxu0 %v1416
        %1434 = vmatpush1.msra.mxu0 %v1415
        %1435 = vmatprep.subr.mxu0 %v1418
        %1436 = vmatpush1.msra.mxu0 %v1417
        %1437 = vmatprep.subr.mxu0 %v1420
        %1438 = vmatpush1.msra.mxu0 %v1419
        %1439 = vmatprep.subr.mxu0 %v1422
        %1440 = vmatpush1.msra.mxu0 %v1421
        %1441 = vmatprep.subr.mxu0 %v1424
        %1442 = vmatpush1.msra.mxu0 %v1423
        %1443 = vmatprep.subr.mxu0 0.0
        %1444 = vmatpush1.msra.mxu0 0.0
        %1445 = vmatprep.subr.mxu0 0.0
        %1446 = vmatpush1.msra.mxu0 0.0
        %1447 = vmatprep.subr.mxu0 0.0
        %1448 = vmatpush1.msra.mxu0 0.0
        %1449 = vmatprep.subr.mxu0 0.0
        %1450 = vmatpush1.msra.mxu0 0.0
        %1451 = vmatprep.subr.mxu0 0.0
        %1452 = vmatpush1.msra.mxu0 0.0
        %1453 = vmatprep.subr.mxu0 0.0
        %1454 = vmatpush1.msra.mxu0 0.0
        %1455 = vmatprep.subr.mxu0 0.0
        %1456 = vmatpush1.msra.mxu0 0.0
        %1457 = vmatprep.subr.mxu0 0.0
        %1458 = vmatpush1.msra.mxu0 0.0
        %1459 = vmatprep.subr.mxu0 0.0
        %1460 = vmatpush1.msra.mxu0 0.0
        %1461 = vmatprep.subr.mxu0 0.0
        %1462 = vmatpush1.msra.mxu0 0.0
        %1463 = vmatprep.subr.mxu0 0.0
        %1464 = vmatpush1.msra.mxu0 0.0
        %1465 = vmatprep.subr.mxu0 0.0
        %1466 = vmatpush1.msra.mxu0 0.0
        %1467 = vmatprep.subr.mxu0 0.0
        %1468 = vmatpush1.msra.mxu0 0.0
        %1469 = vmatprep.subr.mxu0 0.0
        %1470 = vmatpush1.msra.mxu0 0.0
        %1471 = vmatprep.subr.mxu0 0.0
        %1472 = vmatpush1.msra.mxu0 0.0
        %1473 = vmatprep.subr.mxu0 0.0
        %1474 = vmatpush1.msra.mxu0 0.0
        %1475 = vmatprep.subr.mxu0 0.0
        %1476 = vmatpush1.msra.mxu0 0.0
        %1477 = vmatprep.subr.mxu0 0.0
        %1478 = vmatpush1.msra.mxu0 0.0
        %1479 = vmatprep.subr.mxu0 0.0
        %1480 = vmatpush1.msra.mxu0 0.0
        %1481 = vmatprep.subr.mxu0 0.0
        %1482 = vmatpush1.msra.mxu0 0.0
        %1483 = vmatprep.subr.mxu0 0.0
        %1484 = vmatpush1.msra.mxu0 0.0
        %1485 = vmatprep.subr.mxu0 0.0
        %1486 = vmatpush1.msra.mxu0 0.0
        %1487 = vmatprep.subr.mxu0 0.0
        %1488 = vmatpush1.msra.mxu0 0.0
        %1489 = vmatprep.mubr.f32.mxu0 0.0
        %1490 = vmatmul.mubr.f32.gmra.mrb[0].mxu0 %v1255
        %v1491 = vpop.f32.mrb[0].mxu0
        %v1492 = vadd.f32 %v1216, %v1491
        %v1493 = vpop.f32.mrb[0].mxu0
        %v1494 = vadd.f32 %v1216, %v1493
        %1495 = vmatprep.mubr.f32.mxu0 0.0
        %1496 = vmatmul.mubr.f32.gmra.mrb[0].mxu0 %v1258
        %v1497 = vpop.f32.mrb[0].mxu0
        %v1498 = vadd.f32 %v1221, %v1497
        %v1499 = vpop.f32.mrb[0].mxu0
        %v1500 = vadd.f32 %v1221, %v1499
        %1501 = vmatprep.mubr.f32.mxu0 0.0
        %1502 = vmatmul.mubr.f32.gmra.mrb[0].mxu0 %v1261
        %v1503 = vpop.f32.mrb[0].mxu0
        %v1504 = vadd.f32 %v1226, %v1503
        %v1505 = vpop.f32.mrb[0].mxu0
        %v1506 = vadd.f32 %v1226, %v1505
        %1507 = vmatprep.mubr.f32.mxu0 0.0
        %1508 = vmatmul.mubr.f32.gmra.mrb[0].mxu0 %v1264
        %v1509 = vpop.f32.mrb[0].mxu0
        %v1510 = vadd.f32 %v1231, %v1509
        %v1511 = vpop.f32.mrb[0].mxu0
        %v1512 = vadd.f32 %v1231, %v1511
        %1513 = vmatprep.mubr.f32.mxu0 0.0
        %1514 = vmatmul.mubr.f32.gmra.mrb[0].mxu0 %v1267
        %v1515 = vpop.f32.mrb[0].mxu0
        %v1516 = vadd.f32 %v1236, %v1515
        %v1517 = vpop.f32.mrb[0].mxu0
        %v1518 = vadd.f32 %v1236, %v1517
        %1519 = vmatprep.mubr.f32.mxu0 0.0
        %1520 = vmatmul.mubr.f32.gmra.mrb[0].mxu0 %v1270
        %v1521 = vpop.f32.mrb[0].mxu0
        %v1522 = vadd.f32 %v1241, %v1521
        %v1523 = vpop.f32.mrb[0].mxu0
        %v1524 = vadd.f32 %v1241, %v1523
        %1525 = vmatprep.mubr.f32.mxu0 0.0
        %1526 = vmatmul.mubr.f32.gmra.mrb[0].mxu0 %v1273
        %v1527 = vpop.f32.mrb[0].mxu0
        %v1528 = vadd.f32 %v1246, %v1527
        %v1529 = vpop.f32.mrb[0].mxu0
        %v1530 = vadd.f32 %v1246, %v1529
        %1531 = vmatprep.mubr.f32.mxu0 0.0
        %1532 = vmatmul.mubr.f32.gmra.mrb[0].mxu0 %v1276
        %v1533 = vpop.f32.mrb[0].mxu0
        %v1534 = vadd.f32 %v1251, %v1533
        %v1535 = vpop.f32.mrb[0].mxu0
        %v1536 = vadd.f32 %v1251, %v1535
        %1537 = vdwg.mxu0
        %s1538 = scalar_lea.vmem %s344, 128 [#allocation7]
        %1539 = vst [vmem:[%s1538] sm:$0xff] %v1492
        %1540 = vst [vmem:[%s1538 + $0x8] sm:$0xff] %v1494
        %1541 = vst [vmem:[%s1538 + $0x10] sm:$0xff] %v1498
        %1542 = vst [vmem:[%s1538 + $0x18] sm:$0xff] %v1500
        %1543 = vst [vmem:[%s1538 + $0x20] sm:$0xff] %v1504
        %1544 = vst [vmem:[%s1538 + $0x28] sm:$0xff] %v1506
        %1545 = vst [vmem:[%s1538 + $0x30] sm:$0xff] %v1510
        %1546 = vst [vmem:[%s1538 + $0x38] sm:$0xff] %v1512
        %1547 = vst [vmem:[%s1538 + $0x40] sm:$0xff] %v1516
        %1548 = vst [vmem:[%s1538 + $0x48] sm:$0xff] %v1518
        %1549 = vst [vmem:[%s1538 + $0x50] sm:$0xff] %v1522
        %1550 = vst [vmem:[%s1538 + $0x58] sm:$0xff] %v1524
        %1551 = vst [vmem:[%s1538 + $0x60] sm:$0xff] %v1528
        %1552 = vst [vmem:[%s1538 + $0x68] sm:$0xff] %v1530
        %1553 = vst [vmem:[%s1538 + $0x70] sm:$0xff] %v1534
        %1554 = vst [vmem:[%s1538 + $0x78] sm:$0xff] %v1536
        %s1555 = sand.u32 %s198, 1
        %s1556 = scalar_lea.sflag [#allocation6], %s1555
        %s1557 = sand.u32 %s198, 1
        %s1558 = smul.addr %s1557, 256
        %s1559 = scalar_lea.vmem [#allocation7], %s1558
        // Predicated region
        $region49: #{_run_agents.1} parent=43 // pred_check
          %p1560 = pneg %p208
        $region50: #{_run_agents.1} parent=43 // pred_check_branch
          %1562 = sbr.rel (%p1560) target = $region52
        $region51: #{_run_agents.1} parent=43 // pred_region
          %s1563 = smul.u32 2, %s28
          %s1565 = ssub.s32 4096, 4096
          %1566 = vsyncadd %s1556, %s1565
          %s1567 = smul.addr %s1563, 16
          %s1568 = smul.addr %s27, 32
          %s1569 = sadd.s32 %s1567, %s1568
          %s1570 = smul.addr %s1569, 128
          %s1571 = scalar_lea.hbm %s6, %s1570
          %s1572 = sshll.u32 %s1559, 4
          %s1573 = int_to_ptr.vmem [resolvable:$true] %s1572
          %1578 = dma.vmem_to_hbm [thread:$0]  %s1573, 4096, %s1571, %s1556, 256, 256, 16
        $region52: #{_run_agents.1} parent=43 // pred_fallthru
          _
      $region44: #{_run_agents.1} parent=5 // pred_fallthru
        _
      %p1579 = scmp.le.s32.totalorder 2, %s18
      // Predicated region
      $region53: #{_run_agents.1} parent=5 // pred_check
        %p1580 = pneg %p1579
      $region54: #{_run_agents.1} parent=5 // pred_check_branch
        %1582 = sbr.rel (%p1580) target = $region56
      $region55: #{_run_agents.1} parent=5 // pred_region
        %s1583 = ssub.s32 %s18, 2
        // Predicated region
        $region57: #{_run_agents.1} parent=55 // pred_check
          %p1584 = pneg %p214
        $region58: #{_run_agents.1} parent=55 // pred_check_branch
          %1586 = sbr.rel (%p1584) target = $region60
        $region59: #{_run_agents.1} parent=55 // pred_region
          %s1587 = sand.u32 %s199, 1
          %s1588 = scalar_lea.sflag [#allocation6], %s1587
          %s1589 = sand.u32 %s199, 1
          %s1590 = smul.addr %s1589, 256
          %s1591 = scalar_lea.vmem [#allocation7], %s1590
          %1592 = dma.done %s1588, 4096
        $region60: #{_run_agents.1} parent=55 // pred_fallthru
          _
      $region56: #{_run_agents.1} parent=5 // pred_fallthru
        _
    $region6: #{_run_agents.1} parent=1 // loop_footer
      %s22 = sadd.s32 1, %s18
    $region7: #{_run_agents.1} parent=1 // loop_footer_branch
      %17 = sbr.rel target = $region3
    $region8: #{_run_agents.1} parent=1 // loop_exit
      _
    %1593 = vsyncpa [#allocation5], 1
    %s1594 = scalar_lea.sflag [#allocation5], 1
    %1595 = vsyncpa %s1594, 1
    %1596 = vsyncpa [#allocation6], 1
    %s1597 = scalar_lea.sflag [#allocation6], 1
    %1598 = vsyncpa %s1597, 1

</llo_original>
